<compile_context>
chip_gen: v5e
topology: v5e:2x2
jax: 0.10.0
libtpu: 0.0.40
codegen_flags: <defaults>
</compile_context>

<pallas_src>
import math
import functools

import jax
import jax.numpy as jnp
from jax import lax
from jax.experimental import pallas as pl
from jax.experimental.pallas import tpu as pltpu


# ----------------------------------------------------------------------------
# Kernel: one (batch, query-tile) slab per grid step.
#   q_ref      : (tq, D)     k_ref / v_ref : (S, D)     D = n_heads * d_k
#   wqkv_ref   : (3, D, D)   bf16, stacked w_q/w_k/w_v as x @ W  (w_q pre-scaled)
#   bqkv_ref   : (3, 1, D)   f32  (b_q pre-scaled)
#   wo_ref     : (D, D) bf16     bo_ref : (1, D) f32
#   [bias_ref] : (tq, S) f32 additive mask bias (only when mask_mode == "bias")
#   o_ref      : (tq, D) f32
#   ctx_ref    : (tq, D) f32 VMEM scratch for the merged per-head context
# ----------------------------------------------------------------------------
def _mhb_kernel(q_ref, k_ref, v_ref, wqkv_ref, bqkv_ref, wo_ref, bo_ref, *rest,
                n_heads, d_k, mask_mode):
    if mask_mode == "bias":
        bias_ref, o_ref, ctx_ref = rest
    else:
        o_ref, ctx_ref = rest

    tq, D = q_ref.shape
    S = k_ref.shape[0]
    f32 = jnp.float32
    bf16 = jnp.bfloat16

    # --- fused Q/K/V projections: bf16 MXU operands, f32 accumulation --------
    # (1/sqrt(d_k) is already folded into w_q / b_q at parameter-prep time.)
    query = jnp.dot(q_ref[...].astype(bf16), wqkv_ref[0],
                    preferred_element_type=f32) + bqkv_ref[0]
    key = jnp.dot(k_ref[...].astype(bf16), wqkv_ref[1],
                  preferred_element_type=f32) + bqkv_ref[1]
    value = jnp.dot(v_ref[...].astype(bf16), wqkv_ref[2],
                    preferred_element_type=f32) + bqkv_ref[2]

    # --- attention bias -------------------------------------------------------
    if mask_mode == "causal":
        # Generate the causal additive bias in-kernel: no S^2 HBM read/VMEM
        # residency, just a couple of VPU compares in a slot with slack.
        row0 = pl.program_id(1) * tq
        rows = lax.broadcasted_iota(jnp.int32, (tq, S), 0) + row0
        cols = lax.broadcasted_iota(jnp.int32, (tq, S), 1)
        bias = jnp.where(cols > rows, f32(-1e9), f32(0.0))
    elif mask_mode == "bias":
        bias = bias_ref[...]
    else:
        bias = None

    q_bf = query.astype(bf16)
    k_bf = key.astype(bf16)
    v_bf = value.astype(bf16)

    # TODO(synk): for production n_heads / S, move this static unroll to a
    # lax.fori_loop (or a grid axis) and flash-tile the KV axis with an online
    # softmax; at the sizes exercised here each head's (tq, S) temporaries fit
    # comfortably in registers.
    for h in range(n_heads):                                   # static unroll
        lo = h * d_k
        qh = q_bf[:, lo:lo + d_k]                              # (tq, d_k) bf16
        kh = k_bf[:, lo:lo + d_k]                              # (S,  d_k)
        vh = v_bf[:, lo:lo + d_k]

        # scores = qh @ kh^T : contract last dims of both (no explicit .T)
        s = lax.dot_general(qh, kh, (((1,), (1,)), ((), ())),
                            preferred_element_type=f32)        # (tq, S) f32
        if bias is not None:
            s = s + bias

        m = jnp.max(s, axis=-1, keepdims=True)
        e = jnp.exp(s - m)
        denom = jnp.sum(e, axis=-1, keepdims=True)
        # TODO(synk): attention-probability dropout omitted (identity in eval).
        p = (e * pl.reciprocal(denom, approx=True)).astype(bf16)

        # per-head context written to its static column slice of the scratch
        ctx_ref[:, lo:lo + d_k] = jnp.dot(p, vh, preferred_element_type=f32)

    # --- single full-D output projection --------------------------------------
    out = jnp.dot(ctx_ref[...].astype(bf16), wo_ref[...],
                  preferred_element_type=f32) + bo_ref[...]
    o_ref[...] = out.astype(o_ref.dtype)


# ----------------------------------------------------------------------------
# One-time parameter prep (hoisted out of the per-call forward path).
# ----------------------------------------------------------------------------
def prepare_params(params, n_heads):
    D = params["w_q"].shape[0]
    assert D % n_heads == 0
    d_k = D // n_heads
    scale = 1.0 / math.sqrt(d_k)
    wqkv = jnp.stack([params["w_q"] * scale, params["w_k"], params["w_v"]])
    bqkv = jnp.stack([params["b_q"] * scale, params["b_k"], params["b_v"]])
    return {
        "wqkv": wqkv.astype(jnp.bfloat16),                        # (3, D, D)
        "bqkv": bqkv.reshape(3, 1, D).astype(jnp.float32),        # (3, 1, D)
        "w_o": params["w_o"].astype(jnp.bfloat16),                # (D, D)
        "b_o": params["b_o"].reshape(1, D).astype(jnp.float32),   # (1, D)
    }


def _pick_q_tile(S):
    for t in (512, 256, 128):
        if S % t == 0 and S > t:
            return t
    return S


def _vmem_cap_bytes():
    try:
        return int(pltpu.get_tpu_info().vmem_capacity_bytes)
    except Exception:
        return 64 * 1024 * 1024   # v7x-safe default


# ----------------------------------------------------------------------------
# MultiHeadBlock forward (matches the PyTorch module semantics, dropout = id).
# ----------------------------------------------------------------------------
def multi_head_block_forward(prepared, q, k, v, mask, n_heads, *, causal=False):
    B, S, D = q.shape
    assert D % n_heads == 0
    d_k = D // n_heads
    tq = _pick_q_tile(S)
    n_qt = S // tq

    if causal:
        mask_mode = "causal"
    elif mask is not None:
        mask_mode = "bias"
    else:
        mask_mode = "none"

    operands = [q, k, v, prepared["wqkv"], prepared["bqkv"],
                prepared["w_o"], prepared["b_o"]]

    bias_spec_fn = None
    if mask_mode == "bias":
        m = jnp.asarray(mask)
        if m.ndim == 4:
            # TODO(synk): per-head masks not supported (head dim must be 1).
            assert m.shape[1] == 1, "per-head masks not supported"
        m = m.reshape((-1, S, S))
        Bm = m.shape[0]
        assert Bm in (1, B), "mask batch dim must broadcast to B"
        bias = jnp.where(m == 0, jnp.float32(-1e9), jnp.float32(0.0))
        operands.append(bias)
        if Bm == B:
            bias_spec_fn = lambda b, i: (b, i, 0)
        else:
            bias_spec_fn = lambda b, i: (0, i, 0)

    kernel = functools.partial(_mhb_kernel, n_heads=n_heads, d_k=d_k,
                               mask_mode=mask_mode)

    # --- explicit VMEM budget sized to the working set -----------------------
    weight_bytes = 2 * (3 * D * D + D * D) + 4 * (3 * D + D)          # bf16 W, f32 b
    act_bytes = 4 * (2 * tq * D + 2 * S * D)                          # q,out + k,v blocks
    tmp_bytes = 4 * (tq * D + 2 * S * D) + 6 * 4 * tq * S + 4 * tq * D
    est = 2 * act_bytes + weight_bytes + tmp_bytes
    if mask_mode == "bias":
        est += 2 * 4 * tq * S
    vmem_limit = int(min(max(4 * est, 32 * 1024 * 1024),
                         int(0.9 * _vmem_cap_bytes())))

    flops = B * (3 * 2 * S * D * D + 2 * 2 * S * S * D + 2 * S * D * D)
    bytes_accessed = (4 * 4 * B * S * D + weight_bytes
                      + (4 * B * S * S if mask_mode == "bias" else 0))
    cost = pl.CostEstimate(flops=flops, transcendentals=n_heads * B * S * S,
                           bytes_accessed=bytes_accessed)

    slab_q = lambda b, i: (b, i, 0)
    slab_kv = lambda b, i: (b, 0, 0)

    def build(single_buffer_consts):
        const_kw = (dict(pipeline_mode=pl.Buffered(1))
                    if single_buffer_consts else {})
        in_specs = [
            pl.BlockSpec((None, tq, D), slab_q),                     # q tile
            pl.BlockSpec((None, S, D), slab_kv),                     # k (full S)
            pl.BlockSpec((None, S, D), slab_kv),                     # v (full S)
            pl.BlockSpec((3, D, D), lambda b, i: (0, 0, 0), **const_kw),
            pl.BlockSpec((3, 1, D), lambda b, i: (0, 0, 0), **const_kw),
            pl.BlockSpec((D, D), lambda b, i: (0, 0), **const_kw),
            pl.BlockSpec((1, D), lambda b, i: (0, 0), **const_kw),
        ]
        if mask_mode == "bias":
            in_specs.append(pl.BlockSpec((None, tq, S), bias_spec_fn))
        return pl.pallas_call(
            kernel,
            out_shape=jax.ShapeDtypeStruct((B, S, D), jnp.float32),
            grid=(B, n_qt),
            in_specs=in_specs,
            out_specs=pl.BlockSpec((None, tq, D), slab_q),
            scratch_shapes=[pltpu.VMEM((tq, D), jnp.float32)],
            compiler_params=pltpu.CompilerParams(
                dimension_semantics=("parallel", "parallel"),
                vmem_limit_bytes=vmem_limit),
            cost_estimate=cost,
        )

    try:
        out = build(True)(*operands)
        return jax.block_until_ready(out)
    except Exception:
        # pipeline_mode=pl.Buffered(1) unsupported on this jax build: fall back
        # to default double buffering of the constant weight blocks.
        return build(False)(*operands)


# ----------------------------------------------------------------------------
# Deterministic parameter init (PyTorch-Linear-like uniform init).
# Weights stored as (D_in, D_out), i.e. W^T relative to PyTorch's (out, in).
# ----------------------------------------------------------------------------
def init_params(key, d_model):
    bound = 1.0 / math.sqrt(d_model)
    names = ["w_q", "b_q", "w_k", "b_k", "w_v", "b_v", "w_o", "b_o"]
    keys = jax.random.split(key, len(names))
    params = {}
    for name, kk in zip(names, keys):
        if name.startswith("w_"):
            params[name] = jax.random.uniform(
                kk, (d_model, d_model), jnp.float32, -bound, bound)
        else:
            params[name] = jax.random.uniform(
                kk, (d_model,), jnp.float32, -bound, bound)
    return params


# ----------------------------------------------------------------------------
# Pure-JAX f32 reference (faithful to the PyTorch module) for sanity checking.
# ----------------------------------------------------------------------------
def reference_forward(params, q, k, v, mask, n_heads):
    B, S, D = q.shape
    d_k = D // n_heads
    query = q @ params["w_q"] + params["b_q"]
    key = k @ params["w_k"] + params["b_k"]
    value = v @ params["w_v"] + params["b_v"]

    def split(x):
        return x.reshape(B, S, n_heads, d_k).transpose(0, 2, 1, 3)

    qh, kh, vh = split(query), split(key), split(value)
    scores = jnp.einsum("bhqd,bhkd->bhqk", qh, kh) / math.sqrt(d_k)
    scores = jnp.where(mask == 0, -1e9, scores)
    p = jax.nn.softmax(scores, axis=-1)
    x = jnp.einsum("bhqk,bhkd->bhqd", p, vh)
    x = x.transpose(0, 2, 1, 3).reshape(B, S, D)
    return x @ params["w_o"] + params["b_o"]


if __name__ == "__main__":
    B, S, d_model, n_heads = 2, 8, 32, 4

    key = jax.random.PRNGKey(0)
    k_params, k_q, k_k, k_v = jax.random.split(key, 4)

    params = init_params(k_params, d_model)
    prepared = prepare_params(params, n_heads)      # one-time prep (review item)

    q = jax.random.normal(k_q, (B, S, d_model), jnp.float32)
    k = jax.random.normal(k_k, (B, S, d_model), jnp.float32)
    v = jax.random.normal(k_v, (B, S, d_model), jnp.float32)

    # Causal mask (1, 1, S, S), int32 — broadcast over batch & heads.
    mask = jnp.tril(jnp.ones((S, S), jnp.int32)).reshape(1, 1, S, S)

    ref = reference_forward(params, q, k, v, mask, n_heads)

    # Path 1: causal bias generated in-kernel (no S^2 HBM read).
    out_causal = multi_head_block_forward(prepared, q, k, v, None, n_heads,
                                          causal=True)
    out_causal = jax.block_until_ready(out_causal)

    # Path 2: arbitrary mask tensor, converted once to an additive f32 bias.
    out_masked = multi_head_block_forward(prepared, q, k, v, mask, n_heads)
    out_masked = jax.block_until_ready(out_masked)

    assert out_causal.shape == (B, S, d_model)
    assert out_masked.shape == (B, S, d_model)
    # bf16 MXU operands (f32 accumulation) => compare against the f32 reference
    # at a bf16-appropriate tolerance (~1e-2 expected error).
    assert jnp.allclose(out_causal, ref, atol=5e-2, rtol=5e-2), "causal path mismatch"
    assert jnp.allclose(out_masked, ref, atol=5e-2, rtol=5e-2), "masked path mismatch"

    print("KERNEL_OK")
</pallas_src>

<mosaic_0001>
module attributes {stable_mosaic.version = 11 : i64} {
  func.func @_mhb_kernel(%arg0: i32, %arg1: i32, %arg2: memref<1x8x32xf32, #tpu.memory_space<vmem>>, %arg3: memref<1x8x32xf32, #tpu.memory_space<vmem>>, %arg4: memref<1x8x32xf32, #tpu.memory_space<vmem>>, %arg5: memref<3x32x32xbf16, #tpu.memory_space<vmem>>, %arg6: memref<3x1x32xf32, #tpu.memory_space<vmem>>, %arg7: memref<32x32xbf16, #tpu.memory_space<vmem>>, %arg8: memref<1x32xf32, #tpu.memory_space<vmem>>, %arg9: memref<1x8x32xf32, #tpu.memory_space<vmem>>, %arg10: memref<8x32xf32, #tpu.memory_space<vmem>>) attributes {dimension_semantics = [#tpu.dimension_semantics<parallel>, #tpu.dimension_semantics<parallel>], iteration_bounds = array<i64: 2, 1>, scalar_prefetch = 0 : i64, scratch_operands = 1 : i64, tpu.core_type = #tpu.core_type<tc>, window_params = [{transform_indices = @transform_0, window_bounds = array<i64: 1, 8, 32>}, {transform_indices = @transform_1, window_bounds = array<i64: 1, 8, 32>}, {transform_indices = @transform_2, window_bounds = array<i64: 1, 8, 32>}, {pipeline_mode = #tpu.pipeline_mode<synchronous>, transform_indices = @transform_3, window_bounds = array<i64: 3, 32, 32>}, {pipeline_mode = #tpu.pipeline_mode<synchronous>, transform_indices = @transform_4, window_bounds = array<i64: 3, 1, 32>}, {pipeline_mode = #tpu.pipeline_mode<synchronous>, transform_indices = @transform_5, window_bounds = array<i64: 32, 32>}, {pipeline_mode = #tpu.pipeline_mode<synchronous>, transform_indices = @transform_6, window_bounds = array<i64: 1, 32>}, {transform_indices = @transform_7, window_bounds = array<i64: 1, 8, 32>}]} {
    %c0 = arith.constant 0 : index
    %c0_0 = arith.constant 0 : index
    %c0_1 = arith.constant 0 : index
    %0 = vector.load %arg2[%c0, %c0_0, %c0_1] : memref<1x8x32xf32, #tpu.memory_space<vmem>>, vector<1x8x32xf32>
    %1 = vector.shape_cast %0 : vector<1x8x32xf32> to vector<8x32xf32>
    %2 = arith.truncf %1 : vector<8x32xf32> to vector<8x32xbf16>
    %c0_2 = arith.constant 0 : index
    %c0_3 = arith.constant 0 : index
    %c0_4 = arith.constant 0 : index
    %3 = vector.load %arg5[%c0_2, %c0_3, %c0_4] : memref<3x32x32xbf16, #tpu.memory_space<vmem>>, vector<1x32x32xbf16>
    %4 = vector.shape_cast %3 : vector<1x32x32xbf16> to vector<32x32xbf16>
    %cst = arith.constant dense<0.000000e+00> : vector<8x32xf32>
    %5 = tpu.matmul %2, %4, %cst {dimension_numbers = #tpu.dot_dimension_numbers<[1], [0], [0], [1], [0, 0, 1, 1], [], []>} : vector<8x32xbf16>, vector<32x32xbf16>, vector<8x32xf32> -> vector<8x32xf32>
    %c0_5 = arith.constant 0 : index
    %c0_6 = arith.constant 0 : index
    %c0_7 = arith.constant 0 : index
    %6 = vector.load %arg6[%c0_5, %c0_6, %c0_7] : memref<3x1x32xf32, #tpu.memory_space<vmem>>, vector<1x1x32xf32>
    %7 = vector.shape_cast %6 : vector<1x1x32xf32> to vector<1x32xf32>
    %8 = vector.broadcast %7 : vector<1x32xf32> to vector<8x32xf32>
    %9 = arith.addf %5, %8 : vector<8x32xf32>
    %c0_8 = arith.constant 0 : index
    %c0_9 = arith.constant 0 : index
    %c0_10 = arith.constant 0 : index
    %10 = vector.load %arg3[%c0_8, %c0_9, %c0_10] : memref<1x8x32xf32, #tpu.memory_space<vmem>>, vector<1x8x32xf32>
    %11 = vector.shape_cast %10 : vector<1x8x32xf32> to vector<8x32xf32>
    %12 = arith.truncf %11 : vector<8x32xf32> to vector<8x32xbf16>
    %c1 = arith.constant 1 : index
    %c0_11 = arith.constant 0 : index
    %c0_12 = arith.constant 0 : index
    %13 = vector.load %arg5[%c1, %c0_11, %c0_12] : memref<3x32x32xbf16, #tpu.memory_space<vmem>>, vector<1x32x32xbf16>
    %14 = vector.shape_cast %13 : vector<1x32x32xbf16> to vector<32x32xbf16>
    %cst_13 = arith.constant dense<0.000000e+00> : vector<8x32xf32>
    %15 = tpu.matmul %12, %14, %cst_13 {dimension_numbers = #tpu.dot_dimension_numbers<[1], [0], [0], [1], [0, 0, 1, 1], [], []>} : vector<8x32xbf16>, vector<32x32xbf16>, vector<8x32xf32> -> vector<8x32xf32>
    %c1_14 = arith.constant 1 : index
    %c0_15 = arith.constant 0 : index
    %c0_16 = arith.constant 0 : index
    %16 = vector.load %arg6[%c1_14, %c0_15, %c0_16] : memref<3x1x32xf32, #tpu.memory_space<vmem>>, vector<1x1x32xf32>
    %17 = vector.shape_cast %16 : vector<1x1x32xf32> to vector<1x32xf32>
    %18 = vector.broadcast %17 : vector<1x32xf32> to vector<8x32xf32>
    %19 = arith.addf %15, %18 : vector<8x32xf32>
    %c0_17 = arith.constant 0 : index
    %c0_18 = arith.constant 0 : index
    %c0_19 = arith.constant 0 : index
    %20 = vector.load %arg4[%c0_17, %c0_18, %c0_19] : memref<1x8x32xf32, #tpu.memory_space<vmem>>, vector<1x8x32xf32>
    %21 = vector.shape_cast %20 : vector<1x8x32xf32> to vector<8x32xf32>
    %22 = arith.truncf %21 : vector<8x32xf32> to vector<8x32xbf16>
    %c2 = arith.constant 2 : index
    %c0_20 = arith.constant 0 : index
    %c0_21 = arith.constant 0 : index
    %23 = vector.load %arg5[%c2, %c0_20, %c0_21] : memref<3x32x32xbf16, #tpu.memory_space<vmem>>, vector<1x32x32xbf16>
    %24 = vector.shape_cast %23 : vector<1x32x32xbf16> to vector<32x32xbf16>
    %cst_22 = arith.constant dense<0.000000e+00> : vector<8x32xf32>
    %25 = tpu.matmul %22, %24, %cst_22 {dimension_numbers = #tpu.dot_dimension_numbers<[1], [0], [0], [1], [0, 0, 1, 1], [], []>} : vector<8x32xbf16>, vector<32x32xbf16>, vector<8x32xf32> -> vector<8x32xf32>
    %c2_23 = arith.constant 2 : index
    %c0_24 = arith.constant 0 : index
    %c0_25 = arith.constant 0 : index
    %26 = vector.load %arg6[%c2_23, %c0_24, %c0_25] : memref<3x1x32xf32, #tpu.memory_space<vmem>>, vector<1x1x32xf32>
    %27 = vector.shape_cast %26 : vector<1x1x32xf32> to vector<1x32xf32>
    %28 = vector.broadcast %27 : vector<1x32xf32> to vector<8x32xf32>
    %29 = arith.addf %25, %28 : vector<8x32xf32>
    %c8_i32 = arith.constant 8 : i32
    %30 = arith.muli %arg1, %c8_i32 : i32
    %31 = tpu.iota {dimensions = array<i32: 0>} : vector<8x8xi32>
    %32 = vector.broadcast %30 : i32 to vector<8x8xi32>
    %33 = arith.addi %31, %32 : vector<8x8xi32>
    %34 = tpu.iota {dimensions = array<i32: 1>} : vector<8x8xi32>
    %35 = arith.cmpi sgt, %34, %33 : vector<8x8xi32>
    %cst_26 = arith.constant -1.000000e+09 : f32
    %cst_27 = arith.constant 0.000000e+00 : f32
    %36 = vector.broadcast %cst_26 : f32 to vector<8x8xf32>
    %37 = vector.broadcast %cst_27 : f32 to vector<8x8xf32>
    %38 = arith.select %35, %36, %37 : vector<8x8xi1>, vector<8x8xf32>
    %39 = arith.truncf %9 : vector<8x32xf32> to vector<8x32xbf16>
    %40 = arith.truncf %19 : vector<8x32xf32> to vector<8x32xbf16>
    %41 = arith.truncf %29 : vector<8x32xf32> to vector<8x32xbf16>
    %42 = vector.extract_strided_slice %39 {offsets = [0, 0], sizes = [8, 8], strides = [1, 1]} : vector<8x32xbf16> to vector<8x8xbf16>
    %43 = vector.extract_strided_slice %40 {offsets = [0, 0], sizes = [8, 8], strides = [1, 1]} : vector<8x32xbf16> to vector<8x8xbf16>
    %44 = vector.extract_strided_slice %41 {offsets = [0, 0], sizes = [8, 8], strides = [1, 1]} : vector<8x32xbf16> to vector<8x8xbf16>
    %cst_28 = arith.constant dense<0.000000e+00> : vector<8x8xf32>
    %45 = tpu.matmul %42, %43, %cst_28 {dimension_numbers = #tpu.dot_dimension_numbers<[1], [1], [0], [0], [0, 0, 1, 0], [], []>} : vector<8x8xbf16>, vector<8x8xbf16>, vector<8x8xf32> -> vector<8x8xf32>
    %46 = arith.addf %45, %38 : vector<8x8xf32>
    %cst_29 = arith.constant dense<0xFF800000> : vector<8xf32>
    %47 = vector.multi_reduction <maximumf>, %46, %cst_29 [1] : vector<8x8xf32> to vector<8xf32>
    %48 = vector.shape_cast %47 : vector<8xf32> to vector<8x1xf32>
    %49 = vector.broadcast %48 : vector<8x1xf32> to vector<8x8xf32>
    %50 = arith.subf %46, %49 : vector<8x8xf32>
    %51 = math.exp %50 : vector<8x8xf32>
    %cst_30 = arith.constant dense<0.000000e+00> : vector<8xf32>
    %52 = vector.multi_reduction <add>, %51, %cst_30 [1] : vector<8x8xf32> to vector<8xf32>
    %53 = vector.shape_cast %52 : vector<8xf32> to vector<8x1xf32>
    %54 = tpu.reciprocal %53 {approx = true} : vector<8x1xf32> -> vector<8x1xf32>
    %55 = vector.broadcast %54 : vector<8x1xf32> to vector<8x8xf32>
    %56 = arith.mulf %51, %55 : vector<8x8xf32>
    %57 = arith.truncf %56 : vector<8x8xf32> to vector<8x8xbf16>
    %cst_31 = arith.constant dense<0.000000e+00> : vector<8x8xf32>
    %58 = tpu.matmul %57, %44, %cst_31 {dimension_numbers = #tpu.dot_dimension_numbers<[1], [0], [0], [1], [0, 0, 1, 1], [], []>} : vector<8x8xbf16>, vector<8x8xbf16>, vector<8x8xf32> -> vector<8x8xf32>
    %c0_32 = arith.constant 0 : index
    %c0_33 = arith.constant 0 : index
    %59 = vector.load %arg10[%c0_32, %c0_33] : memref<8x32xf32, #tpu.memory_space<vmem>>, vector<8x8xf32>
    tpu.vector_store %arg10[%c0_32, %c0_33], %58 {strides = array<i32>} : memref<8x32xf32, #tpu.memory_space<vmem>>, vector<8x8xf32>,
    %60 = vector.extract_strided_slice %39 {offsets = [0, 8], sizes = [8, 8], strides = [1, 1]} : vector<8x32xbf16> to vector<8x8xbf16>
    %61 = vector.extract_strided_slice %40 {offsets = [0, 8], sizes = [8, 8], strides = [1, 1]} : vector<8x32xbf16> to vector<8x8xbf16>
    %62 = vector.extract_strided_slice %41 {offsets = [0, 8], sizes = [8, 8], strides = [1, 1]} : vector<8x32xbf16> to vector<8x8xbf16>
    %cst_34 = arith.constant dense<0.000000e+00> : vector<8x8xf32>
    %63 = tpu.matmul %60, %61, %cst_34 {dimension_numbers = #tpu.dot_dimension_numbers<[1], [1], [0], [0], [0, 0, 1, 0], [], []>} : vector<8x8xbf16>, vector<8x8xbf16>, vector<8x8xf32> -> vector<8x8xf32>
    %64 = arith.addf %63, %38 : vector<8x8xf32>
    %cst_35 = arith.constant dense<0xFF800000> : vector<8xf32>
    %65 = vector.multi_reduction <maximumf>, %64, %cst_35 [1] : vector<8x8xf32> to vector<8xf32>
    %66 = vector.shape_cast %65 : vector<8xf32> to vector<8x1xf32>
    %67 = vector.broadcast %66 : vector<8x1xf32> to vector<8x8xf32>
    %68 = arith.subf %64, %67 : vector<8x8xf32>
    %69 = math.exp %68 : vector<8x8xf32>
    %cst_36 = arith.constant dense<0.000000e+00> : vector<8xf32>
    %70 = vector.multi_reduction <add>, %69, %cst_36 [1] : vector<8x8xf32> to vector<8xf32>
    %71 = vector.shape_cast %70 : vector<8xf32> to vector<8x1xf32>
    %72 = tpu.reciprocal %71 {approx = true} : vector<8x1xf32> -> vector<8x1xf32>
    %73 = vector.broadcast %72 : vector<8x1xf32> to vector<8x8xf32>
    %74 = arith.mulf %69, %73 : vector<8x8xf32>
    %75 = arith.truncf %74 : vector<8x8xf32> to vector<8x8xbf16>
    %cst_37 = arith.constant dense<0.000000e+00> : vector<8x8xf32>
    %76 = tpu.matmul %75, %62, %cst_37 {dimension_numbers = #tpu.dot_dimension_numbers<[1], [0], [0], [1], [0, 0, 1, 1], [], []>} : vector<8x8xbf16>, vector<8x8xbf16>, vector<8x8xf32> -> vector<8x8xf32>
    %c0_38 = arith.constant 0 : index
    %c8 = arith.constant 8 : index
    %77 = vector.load %arg10[%c0_38, %c8] : memref<8x32xf32, #tpu.memory_space<vmem>>, vector<8x8xf32>
    tpu.vector_store %arg10[%c0_38, %c8], %76 {strides = array<i32>} : memref<8x32xf32, #tpu.memory_space<vmem>>, vector<8x8xf32>,
    %78 = vector.extract_strided_slice %39 {offsets = [0, 16], sizes = [8, 8], strides = [1, 1]} : vector<8x32xbf16> to vector<8x8xbf16>
    %79 = vector.extract_strided_slice %40 {offsets = [0, 16], sizes = [8, 8], strides = [1, 1]} : vector<8x32xbf16> to vector<8x8xbf16>
    %80 = vector.extract_strided_slice %41 {offsets = [0, 16], sizes = [8, 8], strides = [1, 1]} : vector<8x32xbf16> to vector<8x8xbf16>
    %cst_39 = arith.constant dense<0.000000e+00> : vector<8x8xf32>
    %81 = tpu.matmul %78, %79, %cst_39 {dimension_numbers = #tpu.dot_dimension_numbers<[1], [1], [0], [0], [0, 0, 1, 0], [], []>} : vector<8x8xbf16>, vector<8x8xbf16>, vector<8x8xf32> -> vector<8x8xf32>
    %82 = arith.addf %81, %38 : vector<8x8xf32>
    %cst_40 = arith.constant dense<0xFF800000> : vector<8xf32>
    %83 = vector.multi_reduction <maximumf>, %82, %cst_40 [1] : vector<8x8xf32> to vector<8xf32>
    %84 = vector.shape_cast %83 : vector<8xf32> to vector<8x1xf32>
    %85 = vector.broadcast %84 : vector<8x1xf32> to vector<8x8xf32>
    %86 = arith.subf %82, %85 : vector<8x8xf32>
    %87 = math.exp %86 : vector<8x8xf32>
    %cst_41 = arith.constant dense<0.000000e+00> : vector<8xf32>
    %88 = vector.multi_reduction <add>, %87, %cst_41 [1] : vector<8x8xf32> to vector<8xf32>
    %89 = vector.shape_cast %88 : vector<8xf32> to vector<8x1xf32>
    %90 = tpu.reciprocal %89 {approx = true} : vector<8x1xf32> -> vector<8x1xf32>
    %91 = vector.broadcast %90 : vector<8x1xf32> to vector<8x8xf32>
    %92 = arith.mulf %87, %91 : vector<8x8xf32>
    %93 = arith.truncf %92 : vector<8x8xf32> to vector<8x8xbf16>
    %cst_42 = arith.constant dense<0.000000e+00> : vector<8x8xf32>
    %94 = tpu.matmul %93, %80, %cst_42 {dimension_numbers = #tpu.dot_dimension_numbers<[1], [0], [0], [1], [0, 0, 1, 1], [], []>} : vector<8x8xbf16>, vector<8x8xbf16>, vector<8x8xf32> -> vector<8x8xf32>
    %c0_43 = arith.constant 0 : index
    %c16 = arith.constant 16 : index
    %95 = vector.load %arg10[%c0_43, %c16] : memref<8x32xf32, #tpu.memory_space<vmem>>, vector<8x8xf32>
    tpu.vector_store %arg10[%c0_43, %c16], %94 {strides = array<i32>} : memref<8x32xf32, #tpu.memory_space<vmem>>, vector<8x8xf32>,
    %96 = vector.extract_strided_slice %39 {offsets = [0, 24], sizes = [8, 8], strides = [1, 1]} : vector<8x32xbf16> to vector<8x8xbf16>
    %97 = vector.extract_strided_slice %40 {offsets = [0, 24], sizes = [8, 8], strides = [1, 1]} : vector<8x32xbf16> to vector<8x8xbf16>
    %98 = vector.extract_strided_slice %41 {offsets = [0, 24], sizes = [8, 8], strides = [1, 1]} : vector<8x32xbf16> to vector<8x8xbf16>
    %cst_44 = arith.constant dense<0.000000e+00> : vector<8x8xf32>
    %99 = tpu.matmul %96, %97, %cst_44 {dimension_numbers = #tpu.dot_dimension_numbers<[1], [1], [0], [0], [0, 0, 1, 0], [], []>} : vector<8x8xbf16>, vector<8x8xbf16>, vector<8x8xf32> -> vector<8x8xf32>
    %100 = arith.addf %99, %38 : vector<8x8xf32>
    %cst_45 = arith.constant dense<0xFF800000> : vector<8xf32>
    %101 = vector.multi_reduction <maximumf>, %100, %cst_45 [1] : vector<8x8xf32> to vector<8xf32>
    %102 = vector.shape_cast %101 : vector<8xf32> to vector<8x1xf32>
    %103 = vector.broadcast %102 : vector<8x1xf32> to vector<8x8xf32>
    %104 = arith.subf %100, %103 : vector<8x8xf32>
    %105 = math.exp %104 : vector<8x8xf32>
    %cst_46 = arith.constant dense<0.000000e+00> : vector<8xf32>
    %106 = vector.multi_reduction <add>, %105, %cst_46 [1] : vector<8x8xf32> to vector<8xf32>
    %107 = vector.shape_cast %106 : vector<8xf32> to vector<8x1xf32>
    %108 = tpu.reciprocal %107 {approx = true} : vector<8x1xf32> -> vector<8x1xf32>
    %109 = vector.broadcast %108 : vector<8x1xf32> to vector<8x8xf32>
    %110 = arith.mulf %105, %109 : vector<8x8xf32>
    %111 = arith.truncf %110 : vector<8x8xf32> to vector<8x8xbf16>
    %cst_47 = arith.constant dense<0.000000e+00> : vector<8x8xf32>
    %112 = tpu.matmul %111, %98, %cst_47 {dimension_numbers = #tpu.dot_dimension_numbers<[1], [0], [0], [1], [0, 0, 1, 1], [], []>} : vector<8x8xbf16>, vector<8x8xbf16>, vector<8x8xf32> -> vector<8x8xf32>
    %c0_48 = arith.constant 0 : index
    %c24 = arith.constant 24 : index
    %113 = vector.load %arg10[%c0_48, %c24] : memref<8x32xf32, #tpu.memory_space<vmem>>, vector<8x8xf32>
    tpu.vector_store %arg10[%c0_48, %c24], %112 {strides = array<i32>} : memref<8x32xf32, #tpu.memory_space<vmem>>, vector<8x8xf32>,
    %c0_49 = arith.constant 0 : index
    %c0_50 = arith.constant 0 : index
    %114 = vector.load %arg10[%c0_49, %c0_50] : memref<8x32xf32, #tpu.memory_space<vmem>>, vector<8x32xf32>
    %115 = arith.truncf %114 : vector<8x32xf32> to vector<8x32xbf16>
    %c0_51 = arith.constant 0 : index
    %c0_52 = arith.constant 0 : index
    %116 = vector.load %arg7[%c0_51, %c0_52] : memref<32x32xbf16, #tpu.memory_space<vmem>>, vector<32x32xbf16>
    %cst_53 = arith.constant dense<0.000000e+00> : vector<8x32xf32>
    %117 = tpu.matmul %115, %116, %cst_53 {dimension_numbers = #tpu.dot_dimension_numbers<[1], [0], [0], [1], [0, 0, 1, 1], [], []>} : vector<8x32xbf16>, vector<32x32xbf16>, vector<8x32xf32> -> vector<8x32xf32>
    %c0_54 = arith.constant 0 : index
    %c0_55 = arith.constant 0 : index
    %118 = vector.load %arg8[%c0_54, %c0_55] : memref<1x32xf32, #tpu.memory_space<vmem>>, vector<1x32xf32>
    %119 = vector.broadcast %118 : vector<1x32xf32> to vector<8x32xf32>
    %120 = arith.addf %117, %119 : vector<8x32xf32>
    %c0_56 = arith.constant 0 : index
    %c0_57 = arith.constant 0 : index
    %c0_58 = arith.constant 0 : index
    %121 = vector.load %arg9[%c0_56, %c0_57, %c0_58] : memref<1x8x32xf32, #tpu.memory_space<vmem>>, vector<1x8x32xf32>
    %122 = vector.shape_cast %121 : vector<1x8x32xf32> to vector<8x32xf32>
    %123 = vector.shape_cast %120 : vector<8x32xf32> to vector<1x8x32xf32>
    tpu.vector_store %arg9[%c0_56, %c0_57, %c0_58], %123 {strides = array<i32>} : memref<1x8x32xf32, #tpu.memory_space<vmem>>, vector<1x8x32xf32>,
    return
  }
  func.func @transform_0(%arg0: i32, %arg1: i32) -> (i32, i32, i32) {
    %c0_i32 = arith.constant 0 : i32
    %c0_i32_0 = arith.constant 0 : i32
    return %arg0, %arg1, %c0_i32 : i32, i32, i32
  }
  func.func @transform_1(%arg0: i32, %arg1: i32) -> (i32, i32, i32) {
    %c0_i32 = arith.constant 0 : i32
    %c0_i32_0 = arith.constant 0 : i32
    %c0_i32_1 = arith.constant 0 : i32
    return %arg0, %c0_i32, %c0_i32_0 : i32, i32, i32
  }
  func.func @transform_2(%arg0: i32, %arg1: i32) -> (i32, i32, i32) {
    %c0_i32 = arith.constant 0 : i32
    %c0_i32_0 = arith.constant 0 : i32
    %c0_i32_1 = arith.constant 0 : i32
    return %arg0, %c0_i32, %c0_i32_0 : i32, i32, i32
  }
  func.func @transform_3(%arg0: i32, %arg1: i32) -> (i32, i32, i32) {
    %c0_i32 = arith.constant 0 : i32
    %c0_i32_0 = arith.constant 0 : i32
    %c0_i32_1 = arith.constant 0 : i32
    %c0_i32_2 = arith.constant 0 : i32
    return %c0_i32, %c0_i32_0, %c0_i32_1 : i32, i32, i32
  }
  func.func @transform_4(%arg0: i32, %arg1: i32) -> (i32, i32, i32) {
    %c0_i32 = arith.constant 0 : i32
    %c0_i32_0 = arith.constant 0 : i32
    %c0_i32_1 = arith.constant 0 : i32
    %c0_i32_2 = arith.constant 0 : i32
    return %c0_i32, %c0_i32_0, %c0_i32_1 : i32, i32, i32
  }
  func.func @transform_5(%arg0: i32, %arg1: i32) -> (i32, i32) {
    %c0_i32 = arith.constant 0 : i32
    %c0_i32_0 = arith.constant 0 : i32
    %c0_i32_1 = arith.constant 0 : i32
    return %c0_i32, %c0_i32_0 : i32, i32
  }
  func.func @transform_6(%arg0: i32, %arg1: i32) -> (i32, i32) {
    %c0_i32 = arith.constant 0 : i32
    %c0_i32_0 = arith.constant 0 : i32
    %c0_i32_1 = arith.constant 0 : i32
    return %c0_i32, %c0_i32_0 : i32, i32
  }
  func.func @transform_7(%arg0: i32, %arg1: i32) -> (i32, i32, i32) {
    %c0_i32 = arith.constant 0 : i32
    %c0_i32_0 = arith.constant 0 : i32
    return %arg0, %arg1, %c0_i32 : i32, i32, i32
  }
}

module attributes {stable_mosaic.version = 11 : i64} {
  func.func @_mhb_kernel(%arg0: i32, %arg1: i32, %arg2: memref<1x8x32xf32, #tpu.memory_space<vmem>>, %arg3: memref<1x8x32xf32, #tpu.memory_space<vmem>>, %arg4: memref<1x8x32xf32, #tpu.memory_space<vmem>>, %arg5: memref<3x32x32xbf16, #tpu.memory_space<vmem>>, %arg6: memref<3x1x32xf32, #tpu.memory_space<vmem>>, %arg7: memref<32x32xbf16, #tpu.memory_space<vmem>>, %arg8: memref<1x32xf32, #tpu.memory_space<vmem>>, %arg9: memref<1x8x32xf32, #tpu.memory_space<vmem>>, %arg10: memref<8x32xf32, #tpu.memory_space<vmem>>) attributes {dimension_semantics = [#tpu.dimension_semantics<parallel>, #tpu.dimension_semantics<parallel>], iteration_bounds = array<i64: 2, 1>, scalar_prefetch = 0 : i64, scratch_operands = 1 : i64, tpu.core_type = #tpu.core_type<tc>, window_params = [{transform_indices = @transform_0, window_bounds = array<i64: 1, 8, 32>}, {transform_indices = @transform_1, window_bounds = array<i64: 1, 8, 32>}, {transform_indices = @transform_2, window_bounds = array<i64: 1, 8, 32>}, {pipeline_mode = #tpu.pipeline_mode<synchronous>, transform_indices = @transform_3, window_bounds = array<i64: 3, 32, 32>}, {pipeline_mode = #tpu.pipeline_mode<synchronous>, transform_indices = @transform_4, window_bounds = array<i64: 3, 1, 32>}, {pipeline_mode = #tpu.pipeline_mode<synchronous>, transform_indices = @transform_5, window_bounds = array<i64: 32, 32>}, {pipeline_mode = #tpu.pipeline_mode<synchronous>, transform_indices = @transform_6, window_bounds = array<i64: 1, 32>}, {transform_indices = @transform_7, window_bounds = array<i64: 1, 8, 32>}]} {
    %c0 = arith.constant 0 : index
    %c0_0 = arith.constant 0 : index
    %c0_1 = arith.constant 0 : index
    %0 = vector.load %arg2[%c0, %c0_0, %c0_1] : memref<1x8x32xf32, #tpu.memory_space<vmem>>, vector<1x8x32xf32>
    %1 = vector.shape_cast %0 : vector<1x8x32xf32> to vector<8x32xf32>
    %2 = arith.truncf %1 : vector<8x32xf32> to vector<8x32xbf16>
    %c0_2 = arith.constant 0 : index
    %c0_3 = arith.constant 0 : index
    %c0_4 = arith.constant 0 : index
    %3 = vector.load %arg5[%c0_2, %c0_3, %c0_4] : memref<3x32x32xbf16, #tpu.memory_space<vmem>>, vector<1x32x32xbf16>
    %4 = vector.shape_cast %3 : vector<1x32x32xbf16> to vector<32x32xbf16>
    %cst = arith.constant dense<0.000000e+00> : vector<8x32xf32>
    %5 = tpu.matmul %2, %4, %cst {dimension_numbers = #tpu.dot_dimension_numbers<[1], [0], [0], [1], [0, 0, 1, 1], [], []>} : vector<8x32xbf16>, vector<32x32xbf16>, vector<8x32xf32> -> vector<8x32xf32>
    %c0_5 = arith.constant 0 : index
    %c0_6 = arith.constant 0 : index
    %c0_7 = arith.constant 0 : index
    %6 = vector.load %arg6[%c0_5, %c0_6, %c0_7] : memref<3x1x32xf32, #tpu.memory_space<vmem>>, vector<1x1x32xf32>
    %7 = vector.shape_cast %6 : vector<1x1x32xf32> to vector<1x32xf32>
    %8 = vector.broadcast %7 : vector<1x32xf32> to vector<8x32xf32>
    %9 = arith.addf %5, %8 : vector<8x32xf32>
    %c0_8 = arith.constant 0 : index
    %c0_9 = arith.constant 0 : index
    %c0_10 = arith.constant 0 : index
    %10 = vector.load %arg3[%c0_8, %c0_9, %c0_10] : memref<1x8x32xf32, #tpu.memory_space<vmem>>, vector<1x8x32xf32>
    %11 = vector.shape_cast %10 : vector<1x8x32xf32> to vector<8x32xf32>
    %12 = arith.truncf %11 : vector<8x32xf32> to vector<8x32xbf16>
    %c1 = arith.constant 1 : index
    %c0_11 = arith.constant 0 : index
    %c0_12 = arith.constant 0 : index
    %13 = vector.load %arg5[%c1, %c0_11, %c0_12] : memref<3x32x32xbf16, #tpu.memory_space<vmem>>, vector<1x32x32xbf16>
    %14 = vector.shape_cast %13 : vector<1x32x32xbf16> to vector<32x32xbf16>
    %cst_13 = arith.constant dense<0.000000e+00> : vector<8x32xf32>
    %15 = tpu.matmul %12, %14, %cst_13 {dimension_numbers = #tpu.dot_dimension_numbers<[1], [0], [0], [1], [0, 0, 1, 1], [], []>} : vector<8x32xbf16>, vector<32x32xbf16>, vector<8x32xf32> -> vector<8x32xf32>
    %c1_14 = arith.constant 1 : index
    %c0_15 = arith.constant 0 : index
    %c0_16 = arith.constant 0 : index
    %16 = vector.load %arg6[%c1_14, %c0_15, %c0_16] : memref<3x1x32xf32, #tpu.memory_space<vmem>>, vector<1x1x32xf32>
    %17 = vector.shape_cast %16 : vector<1x1x32xf32> to vector<1x32xf32>
    %18 = vector.broadcast %17 : vector<1x32xf32> to vector<8x32xf32>
    %19 = arith.addf %15, %18 : vector<8x32xf32>
    %c0_17 = arith.constant 0 : index
    %c0_18 = arith.constant 0 : index
    %c0_19 = arith.constant 0 : index
    %20 = vector.load %arg4[%c0_17, %c0_18, %c0_19] : memref<1x8x32xf32, #tpu.memory_space<vmem>>, vector<1x8x32xf32>
    %21 = vector.shape_cast %20 : vector<1x8x32xf32> to vector<8x32xf32>
    %22 = arith.truncf %21 : vector<8x32xf32> to vector<8x32xbf16>
    %c2 = arith.constant 2 : index
    %c0_20 = arith.constant 0 : index
    %c0_21 = arith.constant 0 : index
    %23 = vector.load %arg5[%c2, %c0_20, %c0_21] : memref<3x32x32xbf16, #tpu.memory_space<vmem>>, vector<1x32x32xbf16>
    %24 = vector.shape_cast %23 : vector<1x32x32xbf16> to vector<32x32xbf16>
    %cst_22 = arith.constant dense<0.000000e+00> : vector<8x32xf32>
    %25 = tpu.matmul %22, %24, %cst_22 {dimension_numbers = #tpu.dot_dimension_numbers<[1], [0], [0], [1], [0, 0, 1, 1], [], []>} : vector<8x32xbf16>, vector<32x32xbf16>, vector<8x32xf32> -> vector<8x32xf32>
    %c2_23 = arith.constant 2 : index
    %c0_24 = arith.constant 0 : index
    %c0_25 = arith.constant 0 : index
    %26 = vector.load %arg6[%c2_23, %c0_24, %c0_25] : memref<3x1x32xf32, #tpu.memory_space<vmem>>, vector<1x1x32xf32>
    %27 = vector.shape_cast %26 : vector<1x1x32xf32> to vector<1x32xf32>
    %28 = vector.broadcast %27 : vector<1x32xf32> to vector<8x32xf32>
    %29 = arith.addf %25, %28 : vector<8x32xf32>
    %c8_i32 = arith.constant 8 : i32
    %30 = arith.muli %arg1, %c8_i32 : i32
    %31 = tpu.iota {dimensions = array<i32: 0>} : vector<8x8xi32>
    %32 = vector.broadcast %30 : i32 to vector<8x8xi32>
    %33 = arith.addi %31, %32 : vector<8x8xi32>
    %34 = tpu.iota {dimensions = array<i32: 1>} : vector<8x8xi32>
    %35 = arith.cmpi sgt, %34, %33 : vector<8x8xi32>
    %cst_26 = arith.constant -1.000000e+09 : f32
    %cst_27 = arith.constant 0.000000e+00 : f32
    %36 = vector.broadcast %cst_26 : f32 to vector<8x8xf32>
    %37 = vector.broadcast %cst_27 : f32 to vector<8x8xf32>
    %38 = arith.select %35, %36, %37 : vector<8x8xi1>, vector<8x8xf32>
    %39 = arith.truncf %9 : vector<8x32xf32> to vector<8x32xbf16>
    %40 = arith.truncf %19 : vector<8x32xf32> to vector<8x32xbf16>
    %41 = arith.truncf %29 : vector<8x32xf32> to vector<8x32xbf16>
    %42 = vector.extract_strided_slice %39 {offsets = [0, 0], sizes = [8, 8], strides = [1, 1]} : vector<8x32xbf16> to vector<8x8xbf16>
    %43 = vector.extract_strided_slice %40 {offsets = [0, 0], sizes = [8, 8], strides = [1, 1]} : vector<8x32xbf16> to vector<8x8xbf16>
    %44 = vector.extract_strided_slice %41 {offsets = [0, 0], sizes = [8, 8], strides = [1, 1]} : vector<8x32xbf16> to vector<8x8xbf16>
    %cst_28 = arith.constant dense<0.000000e+00> : vector<8x8xf32>
    %45 = tpu.matmul %42, %43, %cst_28 {dimension_numbers = #tpu.dot_dimension_numbers<[1], [1], [0], [0], [0, 0, 1, 0], [], []>} : vector<8x8xbf16>, vector<8x8xbf16>, vector<8x8xf32> -> vector<8x8xf32>
    %46 = arith.addf %45, %38 : vector<8x8xf32>
    %cst_29 = arith.constant dense<0xFF800000> : vector<8xf32>
    %47 = vector.multi_reduction <maximumf>, %46, %cst_29 [1] : vector<8x8xf32> to vector<8xf32>
    %48 = vector.shape_cast %47 : vector<8xf32> to vector<8x1xf32>
    %49 = vector.broadcast %48 : vector<8x1xf32> to vector<8x8xf32>
    %50 = arith.subf %46, %49 : vector<8x8xf32>
    %51 = math.exp %50 : vector<8x8xf32>
    %cst_30 = arith.constant dense<0.000000e+00> : vector<8xf32>
    %52 = vector.multi_reduction <add>, %51, %cst_30 [1] : vector<8x8xf32> to vector<8xf32>
    %53 = vector.shape_cast %52 : vector<8xf32> to vector<8x1xf32>
    %54 = tpu.reciprocal %53 {approx = true} : vector<8x1xf32> -> vector<8x1xf32>
    %55 = vector.broadcast %54 : vector<8x1xf32> to vector<8x8xf32>
    %56 = arith.mulf %51, %55 : vector<8x8xf32>
    %57 = arith.truncf %56 : vector<8x8xf32> to vector<8x8xbf16>
    %cst_31 = arith.constant dense<0.000000e+00> : vector<8x8xf32>
    %58 = tpu.matmul %57, %44, %cst_31 {dimension_numbers = #tpu.dot_dimension_numbers<[1], [0], [0], [1], [0, 0, 1, 1], [], []>} : vector<8x8xbf16>, vector<8x8xbf16>, vector<8x8xf32> -> vector<8x8xf32>
    %c0_32 = arith.constant 0 : index
    %c0_33 = arith.constant 0 : index
    %59 = vector.load %arg10[%c0_32, %c0_33] : memref<8x32xf32, #tpu.memory_space<vmem>>, vector<8x8xf32>
    tpu.vector_store %arg10[%c0_32, %c0_33], %58 {strides = array<i32>} : memref<8x32xf32, #tpu.memory_space<vmem>>, vector<8x8xf32>,
    %60 = vector.extract_strided_slice %39 {offsets = [0, 8], sizes = [8, 8], strides = [1, 1]} : vector<8x32xbf16> to vector<8x8xbf16>
    %61 = vector.extract_strided_slice %40 {offsets = [0, 8], sizes = [8, 8], strides = [1, 1]} : vector<8x32xbf16> to vector<8x8xbf16>
    %62 = vector.extract_strided_slice %41 {offsets = [0, 8], sizes = [8, 8], strides = [1, 1]} : vector<8x32xbf16> to vector<8x8xbf16>
    %cst_34 = arith.constant dense<0.000000e+00> : vector<8x8xf32>
    %63 = tpu.matmul %60, %61, %cst_34 {dimension_numbers = #tpu.dot_dimension_numbers<[1], [1], [0], [0], [0, 0, 1, 0], [], []>} : vector<8x8xbf16>, vector<8x8xbf16>, vector<8x8xf32> -> vector<8x8xf32>
    %64 = arith.addf %63, %38 : vector<8x8xf32>
    %cst_35 = arith.constant dense<0xFF800000> : vector<8xf32>
    %65 = vector.multi_reduction <maximumf>, %64, %cst_35 [1] : vector<8x8xf32> to vector<8xf32>
    %66 = vector.shape_cast %65 : vector<8xf32> to vector<8x1xf32>
    %67 = vector.broadcast %66 : vector<8x1xf32> to vector<8x8xf32>
    %68 = arith.subf %64, %67 : vector<8x8xf32>
    %69 = math.exp %68 : vector<8x8xf32>
    %cst_36 = arith.constant dense<0.000000e+00> : vector<8xf32>
    %70 = vector.multi_reduction <add>, %69, %cst_36 [1] : vector<8x8xf32> to vector<8xf32>
    %71 = vector.shape_cast %70 : vector<8xf32> to vector<8x1xf32>
    %72 = tpu.reciprocal %71 {approx = true} : vector<8x1xf32> -> vector<8x1xf32>
    %73 = vector.broadcast %72 : vector<8x1xf32> to vector<8x8xf32>
    %74 = arith.mulf %69, %73 : vector<8x8xf32>
    %75 = arith.truncf %74 : vector<8x8xf32> to vector<8x8xbf16>
    %cst_37 = arith.constant dense<0.000000e+00> : vector<8x8xf32>
    %76 = tpu.matmul %75, %62, %cst_37 {dimension_numbers = #tpu.dot_dimension_numbers<[1], [0], [0], [1], [0, 0, 1, 1], [], []>} : vector<8x8xbf16>, vector<8x8xbf16>, vector<8x8xf32> -> vector<8x8xf32>
    %c0_38 = arith.constant 0 : index
    %c8 = arith.constant 8 : index
    %77 = vector.load %arg10[%c0_38, %c8] : memref<8x32xf32, #tpu.memory_space<vmem>>, vector<8x8xf32>
    tpu.vector_store %arg10[%c0_38, %c8], %76 {strides = array<i32>} : memref<8x32xf32, #tpu.memory_space<vmem>>, vector<8x8xf32>,
    %78 = vector.extract_strided_slice %39 {offsets = [0, 16], sizes = [8, 8], strides = [1, 1]} : vector<8x32xbf16> to vector<8x8xbf16>
    %79 = vector.extract_strided_slice %40 {offsets = [0, 16], sizes = [8, 8], strides = [1, 1]} : vector<8x32xbf16> to vector<8x8xbf16>
    %80 = vector.extract_strided_slice %41 {offsets = [0, 16], sizes = [8, 8], strides = [1, 1]} : vector<8x32xbf16> to vector<8x8xbf16>
    %cst_39 = arith.constant dense<0.000000e+00> : vector<8x8xf32>
    %81 = tpu.matmul %78, %79, %cst_39 {dimension_numbers = #tpu.dot_dimension_numbers<[1], [1], [0], [0], [0, 0, 1, 0], [], []>} : vector<8x8xbf16>, vector<8x8xbf16>, vector<8x8xf32> -> vector<8x8xf32>
    %82 = arith.addf %81, %38 : vector<8x8xf32>
    %cst_40 = arith.constant dense<0xFF800000> : vector<8xf32>
    %83 = vector.multi_reduction <maximumf>, %82, %cst_40 [1] : vector<8x8xf32> to vector<8xf32>
    %84 = vector.shape_cast %83 : vector<8xf32> to vector<8x1xf32>
    %85 = vector.broadcast %84 : vector<8x1xf32> to vector<8x8xf32>
    %86 = arith.subf %82, %85 : vector<8x8xf32>
    %87 = math.exp %86 : vector<8x8xf32>
    %cst_41 = arith.constant dense<0.000000e+00> : vector<8xf32>
    %88 = vector.multi_reduction <add>, %87, %cst_41 [1] : vector<8x8xf32> to vector<8xf32>
    %89 = vector.shape_cast %88 : vector<8xf32> to vector<8x1xf32>
    %90 = tpu.reciprocal %89 {approx = true} : vector<8x1xf32> -> vector<8x1xf32>
    %91 = vector.broadcast %90 : vector<8x1xf32> to vector<8x8xf32>
    %92 = arith.mulf %87, %91 : vector<8x8xf32>
    %93 = arith.truncf %92 : vector<8x8xf32> to vector<8x8xbf16>
    %cst_42 = arith.constant dense<0.000000e+00> : vector<8x8xf32>
    %94 = tpu.matmul %93, %80, %cst_42 {dimension_numbers = #tpu.dot_dimension_numbers<[1], [0], [0], [1], [0, 0, 1, 1], [], []>} : vector<8x8xbf16>, vector<8x8xbf16>, vector<8x8xf32> -> vector<8x8xf32>
    %c0_43 = arith.constant 0 : index
    %c16 = arith.constant 16 : index
    %95 = vector.load %arg10[%c0_43, %c16] : memref<8x32xf32, #tpu.memory_space<vmem>>, vector<8x8xf32>
    tpu.vector_store %arg10[%c0_43, %c16], %94 {strides = array<i32>} : memref<8x32xf32, #tpu.memory_space<vmem>>, vector<8x8xf32>,
    %96 = vector.extract_strided_slice %39 {offsets = [0, 24], sizes = [8, 8], strides = [1, 1]} : vector<8x32xbf16> to vector<8x8xbf16>
    %97 = vector.extract_strided_slice %40 {offsets = [0, 24], sizes = [8, 8], strides = [1, 1]} : vector<8x32xbf16> to vector<8x8xbf16>
    %98 = vector.extract_strided_slice %41 {offsets = [0, 24], sizes = [8, 8], strides = [1, 1]} : vector<8x32xbf16> to vector<8x8xbf16>
    %cst_44 = arith.constant dense<0.000000e+00> : vector<8x8xf32>
    %99 = tpu.matmul %96, %97, %cst_44 {dimension_numbers = #tpu.dot_dimension_numbers<[1], [1], [0], [0], [0, 0, 1, 0], [], []>} : vector<8x8xbf16>, vector<8x8xbf16>, vector<8x8xf32> -> vector<8x8xf32>
    %100 = arith.addf %99, %38 : vector<8x8xf32>
    %cst_45 = arith.constant dense<0xFF800000> : vector<8xf32>
    %101 = vector.multi_reduction <maximumf>, %100, %cst_45 [1] : vector<8x8xf32> to vector<8xf32>
    %102 = vector.shape_cast %101 : vector<8xf32> to vector<8x1xf32>
    %103 = vector.broadcast %102 : vector<8x1xf32> to vector<8x8xf32>
    %104 = arith.subf %100, %103 : vector<8x8xf32>
    %105 = math.exp %104 : vector<8x8xf32>
    %cst_46 = arith.constant dense<0.000000e+00> : vector<8xf32>
    %106 = vector.multi_reduction <add>, %105, %cst_46 [1] : vector<8x8xf32> to vector<8xf32>
    %107 = vector.shape_cast %106 : vector<8xf32> to vector<8x1xf32>
    %108 = tpu.reciprocal %107 {approx = true} : vector<8x1xf32> -> vector<8x1xf32>
    %109 = vector.broadcast %108 : vector<8x1xf32> to vector<8x8xf32>
    %110 = arith.mulf %105, %109 : vector<8x8xf32>
    %111 = arith.truncf %110 : vector<8x8xf32> to vector<8x8xbf16>
    %cst_47 = arith.constant dense<0.000000e+00> : vector<8x8xf32>
    %112 = tpu.matmul %111, %98, %cst_47 {dimension_numbers = #tpu.dot_dimension_numbers<[1], [0], [0], [1], [0, 0, 1, 1], [], []>} : vector<8x8xbf16>, vector<8x8xbf16>, vector<8x8xf32> -> vector<8x8xf32>
    %c0_48 = arith.constant 0 : index
    %c24 = arith.constant 24 : index
    %113 = vector.load %arg10[%c0_48, %c24] : memref<8x32xf32, #tpu.memory_space<vmem>>, vector<8x8xf32>
    tpu.vector_store %arg10[%c0_48, %c24], %112 {strides = array<i32>} : memref<8x32xf32, #tpu.memory_space<vmem>>, vector<8x8xf32>,
    %c0_49 = arith.constant 0 : index
    %c0_50 = arith.constant 0 : index
    %114 = vector.load %arg10[%c0_49, %c0_50] : memref<8x32xf32, #tpu.memory_space<vmem>>, vector<8x32xf32>
    %115 = arith.truncf %114 : vector<8x32xf32> to vector<8x32xbf16>
    %c0_51 = arith.constant 0 : index
    %c0_52 = arith.constant 0 : index
    %116 = vector.load %arg7[%c0_51, %c0_52] : memref<32x32xbf16, #tpu.memory_space<vmem>>, vector<32x32xbf16>
    %cst_53 = arith.constant dense<0.000000e+00> : vector<8x32xf32>
    %117 = tpu.matmul %115, %116, %cst_53 {dimension_numbers = #tpu.dot_dimension_numbers<[1], [0], [0], [1], [0, 0, 1, 1], [], []>} : vector<8x32xbf16>, vector<32x32xbf16>, vector<8x32xf32> -> vector<8x32xf32>
    %c0_54 = arith.constant 0 : index
    %c0_55 = arith.constant 0 : index
    %118 = vector.load %arg8[%c0_54, %c0_55] : memref<1x32xf32, #tpu.memory_space<vmem>>, vector<1x32xf32>
    %119 = vector.broadcast %118 : vector<1x32xf32> to vector<8x32xf32>
    %120 = arith.addf %117, %119 : vector<8x32xf32>
    %c0_56 = arith.constant 0 : index
    %c0_57 = arith.constant 0 : index
    %c0_58 = arith.constant 0 : index
    %121 = vector.load %arg9[%c0_56, %c0_57, %c0_58] : memref<1x8x32xf32, #tpu.memory_space<vmem>>, vector<1x8x32xf32>
    %122 = vector.shape_cast %121 : vector<1x8x32xf32> to vector<8x32xf32>
    %123 = vector.shape_cast %120 : vector<8x32xf32> to vector<1x8x32xf32>
    tpu.vector_store %arg9[%c0_56, %c0_57, %c0_58], %123 {strides = array<i32>} : memref<1x8x32xf32, #tpu.memory_space<vmem>>, vector<1x8x32xf32>,
    return
  }
  func.func @transform_0(%arg0: i32, %arg1: i32) -> (i32, i32, i32) {
    %c0_i32 = arith.constant 0 : i32
    %c0_i32_0 = arith.constant 0 : i32
    return %arg0, %arg1, %c0_i32 : i32, i32, i32
  }
  func.func @transform_1(%arg0: i32, %arg1: i32) -> (i32, i32, i32) {
    %c0_i32 = arith.constant 0 : i32
    %c0_i32_0 = arith.constant 0 : i32
    %c0_i32_1 = arith.constant 0 : i32
    return %arg0, %c0_i32, %c0_i32_0 : i32, i32, i32
  }
  func.func @transform_2(%arg0: i32, %arg1: i32) -> (i32, i32, i32) {
    %c0_i32 = arith.constant 0 : i32
    %c0_i32_0 = arith.constant 0 : i32
    %c0_i32_1 = arith.constant 0 : i32
    return %arg0, %c0_i32, %c0_i32_0 : i32, i32, i32
  }
  func.func @transform_3(%arg0: i32, %arg1: i32) -> (i32, i32, i32) {
    %c0_i32 = arith.constant 0 : i32
    %c0_i32_0 = arith.constant 0 : i32
    %c0_i32_1 = arith.constant 0 : i32
    %c0_i32_2 = arith.constant 0 : i32
    return %c0_i32, %c0_i32_0, %c0_i32_1 : i32, i32, i32
  }
  func.func @transform_4(%arg0: i32, %arg1: i32) -> (i32, i32, i32) {
    %c0_i32 = arith.constant 0 : i32
    %c0_i32_0 = arith.constant 0 : i32
    %c0_i32_1 = arith.constant 0 : i32
    %c0_i32_2 = arith.constant 0 : i32
    return %c0_i32, %c0_i32_0, %c0_i32_1 : i32, i32, i32
  }
  func.func @transform_5(%arg0: i32, %arg1: i32) -> (i32, i32) {
    %c0_i32 = arith.constant 0 : i32
    %c0_i32_0 = arith.constant 0 : i32
    %c0_i32_1 = arith.constant 0 : i32
    return %c0_i32, %c0_i32_0 : i32, i32
  }
  func.func @transform_6(%arg0: i32, %arg1: i32) -> (i32, i32) {
    %c0_i32 = arith.constant 0 : i32
    %c0_i32_0 = arith.constant 0 : i32
    %c0_i32_1 = arith.constant 0 : i32
    return %c0_i32, %c0_i32_0 : i32, i32
  }
  func.func @transform_7(%arg0: i32, %arg1: i32) -> (i32, i32, i32) {
    %c0_i32 = arith.constant 0 : i32
    %c0_i32_0 = arith.constant 0 : i32
    return %arg0, %arg1, %c0_i32 : i32, i32, i32
  }
}

</mosaic_0001>

<llo_original>
// kernel: tpu_custom_call.1
$region0: #{tpu_custom_call.1}
  #allocation0 [shape = 'u32[]', space=smem, size = 0x4, offset = 0x4, fixed_abs, tag = 'smem constant byte address 0x4 - core index']
  #allocation1 [shape = 'u32[72,128]{1,0:T(1,128)}', space=vmem, size = 0x9000, scoped, tag = 'internal scratch']
  #allocation2 [shape = 'f32[8,32]{1,0:T(8,128)}', space=vmem, size = 0x1000, scoped, tag = 'scratch operand']
  %s0 = inlined_call_operand.hbm [shape: f32[2,8,32], index: 0, kind: input, shape index: {}]
  %s1 = inlined_call_operand.hbm [shape: f32[2,8,32], index: 1, kind: input, shape index: {}]
  %s2 = inlined_call_operand.hbm [shape: f32[2,8,32], index: 2, kind: input, shape index: {}]
  %s3 = inlined_call_operand.hbm [shape: bf16[3,32,32], index: 3, kind: input, shape index: {}]
  %s4 = inlined_call_operand.vmem [shape: f32[3,1,32], index: 4, kind: input, shape index: {}]
  %s5 = inlined_call_operand.hbm [shape: bf16[32,32], index: 5, kind: input, shape index: {}]
  %s6 = inlined_call_operand.vmem [shape: f32[1,32], index: 6, kind: input, shape index: {}]
  %s7 = inlined_call_operand.hbm [shape: f32[2,8,32], index: 7, kind: output, shape index: {}]
  %s8 = sld [smem:[#allocation0]]
  $region81: #{tpu_custom_call.1} parent=0
    _
  %s10 = ssub.s32 1, %s8
  %s11 = scalar_select 0, %s10, %s8
  $region1: #{tpu_custom_call.1} parent=0
    #allocation3 [shape = 'u8[8192]{0}', space=vmem, size = 0x2000, scoped, tag = 'input window, operand 0']
    #allocation4 [shape = 's32[2]{0}', space=sflag, size = 0x8, scoped, tag = 'scoped memory for tpu_custom_call.1']
    #allocation5 [shape = 's32[2]{0}', space=sflag, size = 0x8, scoped, tag = 'scoped memory for tpu_custom_call.1']
    #allocation6 [shape = 'u8[8192]{0}', space=vmem, size = 0x2000, scoped, tag = 'input window, operand 1']
    #allocation7 [shape = 's32[2]{0}', space=sflag, size = 0x8, scoped, tag = 'scoped memory for tpu_custom_call.1']
    #allocation8 [shape = 'u8[8192]{0}', space=vmem, size = 0x2000, scoped, tag = 'input window, operand 2']
    #allocation9 [shape = 'u8[24576]{0}', space=vmem, size = 0x6000, scoped, tag = 'input window, operand 3, single buffered']
    #allocation10 [shape = 's32[1]{0}', space=sflag, size = 0x4, scoped, tag = 'scoped memory for tpu_custom_call.1']
    #allocation11 [shape = 'u8[8192]{0}', space=vmem, size = 0x2000, scoped, tag = 'input window, operand 5, single buffered']
    #allocation12 [shape = 'u8[8192]{0}', space=vmem, size = 0x2000, scoped, tag = 'output window, operand 0']
    %12 = vsyncpa [#allocation4], 0
    %s13 = scalar_lea.sflag [#allocation4], 1
    %14 = vsyncpa %s13, 0
    %15 = vsyncpa [#allocation7], 0
    %s16 = scalar_lea.sflag [#allocation7], 1
    %17 = vsyncpa %s16, 0
    %18 = vsyncpa [#allocation10], 0
    %19 = vsyncpa [#allocation5], 0
    %s20 = scalar_lea.sflag [#allocation5], 1
    %21 = vsyncpa %s20, 0
    loop: start=0, step=1, limit=4
    $region2: #{tpu_custom_call.1} parent=1 // loop_pre_header
      _
    $region3: #{tpu_custom_call.1} parent=1 // loop_header
      %s23 = sphi 0, %s27
      %p24 = scmp.ge.s32.totalorder %s23, 4
      %s30 = sphi 0, %s42
      %s31 = sphi 0, %s38
      %s32 = sphi 0, %s30
      %s33 = sphi 0, %s31
      %s34 = sphi 0, %s32
      %s35 = sphi 0, %s33
      %s47 = sphi 0, %s49
      %s50 = sphi 0, %s47
      %s51 = sphi 0, %s50
      %s67 = sphi 0, %s51
      %s73 = sphi 0, %s75
      %s76 = sphi 0, %s73
      %s77 = sphi 0, %s76
      %s93 = sphi 0, %s77
      %s99 = sphi 0, %s101
      %s102 = sphi 0, %s99
      %s103 = sphi 0, %s102
      %s119 = sphi 0, %s103
      %s123 = sphi 0, %s123
      %s125 = sphi 0, %s123
      %s126 = sphi 0, %s125
      %s140 = sphi 0, %s126
      %s144 = sphi 0, %s144
      %s146 = sphi 0, %s144
      %s147 = sphi 0, %s146
      %s161 = sphi 0, %s147
      %s165 = sphi 0, %s165
      %s167 = sphi 0, %s165
      %s168 = sphi 0, %s167
      %s182 = sphi 0, %s168
      %s186 = sphi 0, %s186
      %s188 = sphi 0, %s186
      %s189 = sphi 0, %s188
      %s203 = sphi 0, %s189
      %s211 = sphi 0, %s213
      %s214 = sphi 0, %s211
      %s215 = sphi 0, %s214
      %s231 = sphi 0, %s215
    $region4: #{tpu_custom_call.1} parent=1 // loop_header_branch
      %26 = sbr.rel (%p24) target = $region8
    $region5: #{tpu_custom_call.1} parent=1 // loop_body
      %s28 = ssub.s32 %s23, 1
      %s29 = ssub.s32 %s23, 2
      %s36 = sadd.s32 1, %s31
      %p37 = scmp.ge.s32.totalorder %s36, 1
      %s38 = scalar_select %p37, 0, %s36
      %s39 = sadd.s32 1, %s30
      %s40 = scalar_select %p37, %s39, %s30
      %p41 = scmp.ge.s32.totalorder %s40, 2
      %s42 = scalar_select %p41, 0, %s40
      %s43 = ssub.s32 %s30, %s42
      %s44 = ssub.s32 %s31, %s38
      %s45 = sor.u32 %s43, %s44
      %p46 = scmp.eq.s32.totalorder %s45, 0
      %s48 = sadd.s32 %s47, 1
      %s49 = scalar_select %p46, %s47, %s48
      %p52 = pneg %p46
      %p53 = scmp.eq.s32.totalorder %s23, 1
      %p54 = por %p52, %p53
      %p55 = scmp.ne.s32.totalorder %s47, %s50
      %p56 = scmp.eq.s32.totalorder %s23, 0
      %p57 = por %p55, %p56
      %p58 = scmp.ne.s32.totalorder %s47, %s50
      %p59 = scmp.eq.s32.totalorder %s28, 1
      %p60 = por %p58, %p59
      %p61 = scmp.ne.s32.totalorder %s50, %s51
      %p62 = scmp.eq.s32.totalorder %s28, 0
      %p63 = por %p61, %p62
      %p64 = scmp.ne.s32.totalorder %s50, %s51
      %p65 = scmp.eq.s32.totalorder %s29, 1
      %p66 = por %p64, %p65
      %p68 = scmp.ne.s32.totalorder %s51, %s67
      %p69 = scmp.eq.s32.totalorder %s29, 0
      %p70 = por %p68, %p69
      %s71 = ssub.s32 %s30, %s42
      %p72 = scmp.eq.s32.totalorder %s71, 0
      %s74 = sadd.s32 %s73, 1
      %s75 = scalar_select %p72, %s73, %s74
      %p78 = pneg %p72
      %p79 = scmp.eq.s32.totalorder %s23, 1
      %p80 = por %p78, %p79
      %p81 = scmp.ne.s32.totalorder %s73, %s76
      %p82 = scmp.eq.s32.totalorder %s23, 0
      %p83 = por %p81, %p82
      %p84 = scmp.ne.s32.totalorder %s73, %s76
      %p85 = scmp.eq.s32.totalorder %s28, 1
      %p86 = por %p84, %p85
      %p87 = scmp.ne.s32.totalorder %s76, %s77
      %p88 = scmp.eq.s32.totalorder %s28, 0
      %p89 = por %p87, %p88
      %p90 = scmp.ne.s32.totalorder %s76, %s77
      %p91 = scmp.eq.s32.totalorder %s29, 1
      %p92 = por %p90, %p91
      %p94 = scmp.ne.s32.totalorder %s77, %s93
      %p95 = scmp.eq.s32.totalorder %s29, 0
      %p96 = por %p94, %p95
      %s97 = ssub.s32 %s30, %s42
      %p98 = scmp.eq.s32.totalorder %s97, 0
      %s100 = sadd.s32 %s99, 1
      %s101 = scalar_select %p98, %s99, %s100
      %p104 = pneg %p98
      %p105 = scmp.eq.s32.totalorder %s23, 1
      %p106 = por %p104, %p105
      %p107 = scmp.ne.s32.totalorder %s99, %s102
      %p108 = scmp.eq.s32.totalorder %s23, 0
      %p109 = por %p107, %p108
      %p110 = scmp.ne.s32.totalorder %s99, %s102
      %p111 = scmp.eq.s32.totalorder %s28, 1
      %p112 = por %p110, %p111
      %p113 = scmp.ne.s32.totalorder %s102, %s103
      %p114 = scmp.eq.s32.totalorder %s28, 0
      %p115 = por %p113, %p114
      %p116 = scmp.ne.s32.totalorder %s102, %s103
      %p117 = scmp.eq.s32.totalorder %s29, 1
      %p118 = por %p116, %p117
      %p120 = scmp.ne.s32.totalorder %s103, %s119
      %p121 = scmp.eq.s32.totalorder %s29, 0
      %p122 = por %p120, %p121
      %s124 = sadd.s32 %s123, 1
      %p127 = scmp.eq.s32.totalorder %s23, 1
      %p128 = scmp.ne.s32.totalorder %s123, %s125
      %p129 = scmp.eq.s32.totalorder %s23, 0
      %p130 = por %p128, %p129
      %p131 = scmp.ne.s32.totalorder %s123, %s125
      %p132 = scmp.eq.s32.totalorder %s28, 1
      %p133 = por %p131, %p132
      %p134 = scmp.ne.s32.totalorder %s125, %s126
      %p135 = scmp.eq.s32.totalorder %s28, 0
      %p136 = por %p134, %p135
      %p137 = scmp.ne.s32.totalorder %s125, %s126
      %p138 = scmp.eq.s32.totalorder %s29, 1
      %p139 = por %p137, %p138
      %p141 = scmp.ne.s32.totalorder %s126, %s140
      %p142 = scmp.eq.s32.totalorder %s29, 0
      %p143 = por %p141, %p142
      %s145 = sadd.s32 %s144, 1
      %p148 = scmp.eq.s32.totalorder %s23, 1
      %p149 = scmp.ne.s32.totalorder %s144, %s146
      %p150 = scmp.eq.s32.totalorder %s23, 0
      %p151 = por %p149, %p150
      %p152 = scmp.ne.s32.totalorder %s144, %s146
      %p153 = scmp.eq.s32.totalorder %s28, 1
      %p154 = por %p152, %p153
      %p155 = scmp.ne.s32.totalorder %s146, %s147
      %p156 = scmp.eq.s32.totalorder %s28, 0
      %p157 = por %p155, %p156
      %p158 = scmp.ne.s32.totalorder %s146, %s147
      %p159 = scmp.eq.s32.totalorder %s29, 1
      %p160 = por %p158, %p159
      %p162 = scmp.ne.s32.totalorder %s147, %s161
      %p163 = scmp.eq.s32.totalorder %s29, 0
      %p164 = por %p162, %p163
      %s166 = sadd.s32 %s165, 1
      %p169 = scmp.eq.s32.totalorder %s23, 1
      %p170 = scmp.ne.s32.totalorder %s165, %s167
      %p171 = scmp.eq.s32.totalorder %s23, 0
      %p172 = por %p170, %p171
      %p173 = scmp.ne.s32.totalorder %s165, %s167
      %p174 = scmp.eq.s32.totalorder %s28, 1
      %p175 = por %p173, %p174
      %p176 = scmp.ne.s32.totalorder %s167, %s168
      %p177 = scmp.eq.s32.totalorder %s28, 0
      %p178 = por %p176, %p177
      %p179 = scmp.ne.s32.totalorder %s167, %s168
      %p180 = scmp.eq.s32.totalorder %s29, 1
      %p181 = por %p179, %p180
      %p183 = scmp.ne.s32.totalorder %s168, %s182
      %p184 = scmp.eq.s32.totalorder %s29, 0
      %p185 = por %p183, %p184
      %s187 = sadd.s32 %s186, 1
      %p190 = scmp.eq.s32.totalorder %s23, 1
      %p191 = scmp.ne.s32.totalorder %s186, %s188
      %p192 = scmp.eq.s32.totalorder %s23, 0
      %p193 = por %p191, %p192
      %p194 = scmp.ne.s32.totalorder %s186, %s188
      %p195 = scmp.eq.s32.totalorder %s28, 1
      %p196 = por %p194, %p195
      %p197 = scmp.ne.s32.totalorder %s188, %s189
      %p198 = scmp.eq.s32.totalorder %s28, 0
      %p199 = por %p197, %p198
      %p200 = scmp.ne.s32.totalorder %s188, %s189
      %p201 = scmp.eq.s32.totalorder %s29, 1
      %p202 = por %p200, %p201
      %p204 = scmp.ne.s32.totalorder %s189, %s203
      %p205 = scmp.eq.s32.totalorder %s29, 0
      %p206 = por %p204, %p205
      %s207 = ssub.s32 %s30, %s42
      %s208 = ssub.s32 %s31, %s38
      %s209 = sor.u32 %s207, %s208
      %p210 = scmp.eq.s32.totalorder %s209, 0
      %s212 = sadd.s32 %s211, 1
      %s213 = scalar_select %p210, %s211, %s212
      %p216 = pneg %p210
      %p217 = scmp.eq.s32.totalorder %s23, 1
      %p218 = por %p216, %p217
      %p219 = scmp.ne.s32.totalorder %s211, %s214
      %p220 = scmp.eq.s32.totalorder %s23, 0
      %p221 = por %p219, %p220
      %p222 = scmp.ne.s32.totalorder %s211, %s214
      %p223 = scmp.eq.s32.totalorder %s28, 1
      %p224 = por %p222, %p223
      %p225 = scmp.ne.s32.totalorder %s214, %s215
      %p226 = scmp.eq.s32.totalorder %s28, 0
      %p227 = por %p225, %p226
      %p228 = scmp.ne.s32.totalorder %s214, %s215
      %p229 = scmp.eq.s32.totalorder %s29, 1
      %p230 = por %p228, %p229
      %p232 = scmp.ne.s32.totalorder %s215, %s231
      %p233 = scmp.eq.s32.totalorder %s29, 0
      %p234 = por %p232, %p233
      %p235 = scmp.le.s32.totalorder 1, %s23
      %p236 = scmp.lt.s32.totalorder %s23, 3
      %p237 = pnand %p235, %p236
      %p238 = pneg %p237
      // Predicated region
      $region9: #{tpu_custom_call.1} parent=5 // pred_check
        _
      $region10: #{tpu_custom_call.1} parent=5 // pred_check_branch
        %240 = sbr.rel (%p237) target = $region12
      $region11: #{tpu_custom_call.1} parent=5 // pred_region
        %s241 = ssub.s32 %s23, 1
        // Predicated region
        $region13: #{tpu_custom_call.1} parent=11 // pred_check
          %p242 = pneg %p136
        $region14: #{tpu_custom_call.1} parent=11 // pred_check_branch
          %244 = sbr.rel (%p242) target = $region16
        $region15: #{tpu_custom_call.1} parent=11 // pred_region
          %246 = vsyncadd [#allocation10], 0
          %s247 = sshll.u32 %s3, 4
          %s248 = int_to_ptr.hbm [resolvable:$true] %s247
          %s249 = sshll.u32 [#allocation9], 4
          %s250 = int_to_ptr.vmem [resolvable:$true] %s249
          %255 = dma.hbm_to_vmem [thread:$0]  %s248, 768, %s250, [#allocation10], 64, 64, 4
        $region16: #{tpu_custom_call.1} parent=11 // pred_fallthru
          _
        // Predicated region
        $region17: #{tpu_custom_call.1} parent=11 // pred_check
          %p256 = pneg %p157
        $region18: #{tpu_custom_call.1} parent=11 // pred_check_branch
          %258 = sbr.rel (%p256) target = $region20
        $region19: #{tpu_custom_call.1} parent=11 // pred_region
          _
        $region20: #{tpu_custom_call.1} parent=11 // pred_fallthru
          _
        // Predicated region
        $region21: #{tpu_custom_call.1} parent=11 // pred_check
          %p259 = pneg %p178
        $region22: #{tpu_custom_call.1} parent=11 // pred_check_branch
          %261 = sbr.rel (%p259) target = $region24
        $region23: #{tpu_custom_call.1} parent=11 // pred_region
          %263 = vsyncadd [#allocation10], 0
          %s264 = sshll.u32 %s5, 4
          %s265 = int_to_ptr.hbm [resolvable:$true] %s264
          %s266 = sshll.u32 [#allocation11], 4
          %s267 = int_to_ptr.vmem [resolvable:$true] %s266
          %272 = dma.hbm_to_vmem [thread:$0]  %s265, 256, %s267, [#allocation10], 64, 64, 4
        $region24: #{tpu_custom_call.1} parent=11 // pred_fallthru
          _
        // Predicated region
        $region25: #{tpu_custom_call.1} parent=11 // pred_check
          %p273 = pneg %p199
        $region26: #{tpu_custom_call.1} parent=11 // pred_check_branch
          %275 = sbr.rel (%p273) target = $region28
        $region27: #{tpu_custom_call.1} parent=11 // pred_region
          _
        $region28: #{tpu_custom_call.1} parent=11 // pred_fallthru
          _
      $region12: #{tpu_custom_call.1} parent=5 // pred_fallthru
        _
      %p276 = scmp.lt.s32.totalorder %s23, 2
      // Predicated region
      $region29: #{tpu_custom_call.1} parent=5 // pred_check
        %p277 = pneg %p276
      $region30: #{tpu_custom_call.1} parent=5 // pred_check_branch
        %279 = sbr.rel (%p277) target = $region32
      $region31: #{tpu_custom_call.1} parent=5 // pred_region
        // Predicated region
        $region33: #{tpu_custom_call.1} parent=31 // pred_check
          %p280 = pneg %p57
        $region34: #{tpu_custom_call.1} parent=31 // pred_check_branch
          %282 = sbr.rel (%p280) target = $region36
        $region35: #{tpu_custom_call.1} parent=31 // pred_region
          %s283 = sand.u32 %s47, 1
          %s284 = scalar_lea.sflag [#allocation4], %s283
          %s285 = sand.u32 %s47, 1
          %s286 = smul.addr %s285, 8
          %s287 = scalar_lea.vmem [#allocation3], %s286
          %289 = vsyncadd %s284, 0
          %s290 = sadd.s32 %s31, %s30
          %s291 = smul.addr %s290, 8
          %s292 = scalar_lea.hbm %s0, %s291
          %s294 = sshll.u32 %s292, 4
          %s295 = int_to_ptr.hbm [resolvable:$true] %s294
          %s296 = sshll.u32 %s287, 4
          %s297 = int_to_ptr.vmem [resolvable:$true] %s296
          %299 = dma.hbm_to_vmem [thread:$0]  %s295, 128, %s297, %s284
        $region36: #{tpu_custom_call.1} parent=31 // pred_fallthru
          _
        // Predicated region
        $region37: #{tpu_custom_call.1} parent=31 // pred_check
          %p300 = pneg %p83
        $region38: #{tpu_custom_call.1} parent=31 // pred_check_branch
          %302 = sbr.rel (%p300) target = $region40
        $region39: #{tpu_custom_call.1} parent=31 // pred_region
          %s303 = sand.u32 %s23, 1
          %s304 = scalar_lea.sflag [#allocation7], %s303
          %s305 = sand.u32 %s73, 1
          %s306 = smul.addr %s305, 8
          %s307 = scalar_lea.vmem [#allocation6], %s306
          %309 = vsyncadd %s304, 0
          %s310 = smul.addr %s30, 8
          %s311 = scalar_lea.hbm %s1, %s310
          %s313 = sshll.u32 %s311, 4
          %s314 = int_to_ptr.hbm [resolvable:$true] %s313
          %s315 = sshll.u32 %s307, 4
          %s316 = int_to_ptr.vmem [resolvable:$true] %s315
          %318 = dma.hbm_to_vmem [thread:$0]  %s314, 128, %s316, %s304
        $region40: #{tpu_custom_call.1} parent=31 // pred_fallthru
          _
        // Predicated region
        $region41: #{tpu_custom_call.1} parent=31 // pred_check
          %p319 = pneg %p109
        $region42: #{tpu_custom_call.1} parent=31 // pred_check_branch
          %321 = sbr.rel (%p319) target = $region44
        $region43: #{tpu_custom_call.1} parent=31 // pred_region
          %s322 = sand.u32 %s23, 1
          %s323 = scalar_lea.sflag [#allocation7], %s322
          %s324 = sand.u32 %s99, 1
          %s325 = smul.addr %s324, 8
          %s326 = scalar_lea.vmem [#allocation8], %s325
          %328 = vsyncadd %s323, 0
          %s329 = smul.addr %s30, 8
          %s330 = scalar_lea.hbm %s2, %s329
          %s332 = sshll.u32 %s330, 4
          %s333 = int_to_ptr.hbm [resolvable:$true] %s332
          %s334 = sshll.u32 %s326, 4
          %s335 = int_to_ptr.vmem [resolvable:$true] %s334
          %337 = dma.hbm_to_vmem [thread:$0]  %s333, 128, %s335, %s323
        $region44: #{tpu_custom_call.1} parent=31 // pred_fallthru
          _
      $region32: #{tpu_custom_call.1} parent=5 // pred_fallthru
        _
      %p338 = scmp.le.s32.totalorder 1, %s23
      %p339 = scmp.lt.s32.totalorder %s23, 3
      %p340 = pnand %p338, %p339
      %p341 = pneg %p340
      // Predicated region
      $region45: #{tpu_custom_call.1} parent=5 // pred_check
        _
      $region46: #{tpu_custom_call.1} parent=5 // pred_check_branch
        %343 = sbr.rel (%p340) target = $region48
      $region47: #{tpu_custom_call.1} parent=5 // pred_region
        %s344 = ssub.s32 %s23, 1
        %s345 = sand.u32 %s50, 1
        %s346 = scalar_lea.sflag [#allocation4], %s345
        %s347 = sand.u32 %s50, 1
        %s348 = smul.addr %s347, 8
        %s349 = scalar_lea.vmem [#allocation3], %s348
        // Predicated region
        $region49: #{tpu_custom_call.1} parent=47 // pred_check
          %p350 = pneg %p63
        $region50: #{tpu_custom_call.1} parent=47 // pred_check_branch
          %352 = sbr.rel (%p350) target = $region52
        $region51: #{tpu_custom_call.1} parent=47 // pred_region
          %354 = dma.done %s346, 128
        $region52: #{tpu_custom_call.1} parent=47 // pred_fallthru
          _
        %s355 = sand.u32 %s28, 1
        %s356 = scalar_lea.sflag [#allocation7], %s355
        %s357 = sand.u32 %s76, 1
        %s358 = smul.addr %s357, 8
        %s359 = scalar_lea.vmem [#allocation6], %s358
        // Predicated region
        $region53: #{tpu_custom_call.1} parent=47 // pred_check
          %p360 = pneg %p89
        $region54: #{tpu_custom_call.1} parent=47 // pred_check_branch
          %362 = sbr.rel (%p360) target = $region56
        $region55: #{tpu_custom_call.1} parent=47 // pred_region
          %364 = dma.done %s356, 128
        $region56: #{tpu_custom_call.1} parent=47 // pred_fallthru
          _
        %s365 = sand.u32 %s28, 1
        %s366 = scalar_lea.sflag [#allocation7], %s365
        %s367 = sand.u32 %s102, 1
        %s368 = smul.addr %s367, 8
        %s369 = scalar_lea.vmem [#allocation8], %s368
        // Predicated region
        $region57: #{tpu_custom_call.1} parent=47 // pred_check
          %p370 = pneg %p115
        $region58: #{tpu_custom_call.1} parent=47 // pred_check_branch
          %372 = sbr.rel (%p370) target = $region60
        $region59: #{tpu_custom_call.1} parent=47 // pred_region
          %374 = dma.done %s366, 128
        $region60: #{tpu_custom_call.1} parent=47 // pred_fallthru
          _
        // Predicated region
        $region61: #{tpu_custom_call.1} parent=47 // pred_check
          %p375 = pneg %p136
        $region62: #{tpu_custom_call.1} parent=47 // pred_check_branch
          %377 = sbr.rel (%p375) target = $region64
        $region63: #{tpu_custom_call.1} parent=47 // pred_region
          %379 = dma.done [#allocation10], 768
        $region64: #{tpu_custom_call.1} parent=47 // pred_fallthru
          _
        // Predicated region
        $region65: #{tpu_custom_call.1} parent=47 // pred_check
          %p380 = pneg %p178
        $region66: #{tpu_custom_call.1} parent=47 // pred_check_branch
          %382 = sbr.rel (%p380) target = $region68
        $region67: #{tpu_custom_call.1} parent=47 // pred_region
          %384 = dma.done [#allocation10], 256
        $region68: #{tpu_custom_call.1} parent=47 // pred_fallthru
          _
        %s385 = sand.u32 %s50, 1
        %s386 = scalar_lea.sflag [#allocation4], %s385
        %s387 = sand.u32 %s50, 1
        %s388 = smul.addr %s387, 8
        %s389 = scalar_lea.vmem [#allocation3], %s388
        %p390 = pneg %p63
        %p391 = pneg %p60
        %s392 = sand.u32 %s28, 1
        %s393 = scalar_lea.sflag [#allocation7], %s392
        %s394 = sand.u32 %s76, 1
        %s395 = smul.addr %s394, 8
        %s396 = scalar_lea.vmem [#allocation6], %s395
        %p397 = pneg %p89
        %p398 = pneg %p86
        %s399 = sand.u32 %s28, 1
        %s400 = scalar_lea.sflag [#allocation7], %s399
        %s401 = sand.u32 %s102, 1
        %s402 = smul.addr %s401, 8
        %s403 = scalar_lea.vmem [#allocation8], %s402
        %p404 = pneg %p115
        %p405 = pneg %p112
        %p406 = pneg %p136
        %p407 = pneg %p133
        %p408 = pneg %p157
        %p409 = pneg %p154
        %p410 = pneg %p178
        %p411 = pneg %p175
        %p412 = pneg %p199
        %p413 = pneg %p196
        %p414 = pneg %p227
        %p415 = pneg %p224
        %s416 = sand.u32 %s214, 1
        %s417 = scalar_lea.sflag [#allocation5], %s416
        %s418 = sand.u32 %s214, 1
        %s419 = smul.addr %s418, 8
        %s420 = scalar_lea.vmem [#allocation12], %s419
        %v422 = vld [vmem:[%s349] sm:$0xff]
        %v423 = vpack.c.bf16 %v422, %v422
        %v424 = vld [vmem:[#allocation9] sm:$0xf]
        %v425 = vld [vmem:[#allocation9 + $0x4] sm:$0xf]
        %v426 = vld [vmem:[#allocation9 + $0x8] sm:$0xf]
        %v427 = vld [vmem:[#allocation9 + $0xc] sm:$0xf]
        %v428 = vld [vmem:[%s4] sm:$0x1]
        %v430 = vperm.slane %v428, 0
        %v436 = vunpack.c.l.b16 %v424
        %v437 = vunpack.c.l.b16 %v425
        %v438 = vunpack.c.l.b16 %v426
        %v439 = vunpack.c.l.b16 %v427
        %v440 = vpack.c.b16 %v437, %v436
        %v441 = vpack.c.b16 %v439, %v438
        %vm444 = vcmask 261120
        %v446 = vsel %vm444, %v423, 0
        %448 = vmatpush.bf16.msra.mxu0 0
        %449 = vmatpush.bf16.msra.mxu0 0
        %450 = vmatpush.bf16.msra.mxu0 0
        %451 = vmatpush.bf16.msra.mxu0 0
        %452 = vmatpush.bf16.msra.mxu0 0
        %453 = vmatpush.bf16.msra.mxu0 0
        %454 = vmatpush.bf16.msra.mxu0 %v441
        %455 = vmatpush.bf16.msra.mxu0 %v440
        %456 = vmatmul.bf16.gmra.mxu0 %v446
        %v457 = vpop.f32.mrf.mxu0
        %v458 = vadd.f32 %v430, %v457
        %v459 = vpop.f32.mrf.mxu0
        %460 = vdwg.mxu0
        %v461 = vld [vmem:[%s359] sm:$0xff]
        %v462 = vpack.c.bf16 %v461, %v461
        %s463 = scalar_lea.vmem [#allocation9], 16
        %v464 = vld [vmem:[%s463] sm:$0xf]
        %v465 = vld [vmem:[%s463 + $0x4] sm:$0xf]
        %v466 = vld [vmem:[%s463 + $0x8] sm:$0xf]
        %v467 = vld [vmem:[%s463 + $0xc] sm:$0xf]
        %s468 = scalar_lea.vmem %s4, 1
        %v469 = vld [vmem:[%s468] sm:$0x1]
        %v471 = vperm.slane %v469, 0
        %v477 = vunpack.c.l.b16 %v464
        %v478 = vunpack.c.l.b16 %v465
        %v479 = vunpack.c.l.b16 %v466
        %v480 = vunpack.c.l.b16 %v467
        %v481 = vpack.c.b16 %v478, %v477
        %v482 = vpack.c.b16 %v480, %v479
        %v486 = vsel %vm444, %v462, 0
        %488 = vmatpush.bf16.msra.mxu0 0
        %489 = vmatpush.bf16.msra.mxu0 0
        %490 = vmatpush.bf16.msra.mxu0 0
        %491 = vmatpush.bf16.msra.mxu0 0
        %492 = vmatpush.bf16.msra.mxu0 0
        %493 = vmatpush.bf16.msra.mxu0 0
        %494 = vmatpush.bf16.msra.mxu0 %v482
        %495 = vmatpush.bf16.msra.mxu0 %v481
        %496 = vmatmul.bf16.gmra.mxu0 %v486
        %v497 = vpop.f32.mrf.mxu0
        %v498 = vadd.f32 %v471, %v497
        %v499 = vpop.f32.mrf.mxu0
        %500 = vdwg.mxu0
        %v501 = vld [vmem:[%s369] sm:$0xff]
        %v502 = vpack.c.bf16 %v501, %v501
        %s503 = scalar_lea.vmem [#allocation9], 32
        %v504 = vld [vmem:[%s503] sm:$0xf]
        %v505 = vld [vmem:[%s503 + $0x4] sm:$0xf]
        %v506 = vld [vmem:[%s503 + $0x8] sm:$0xf]
        %v507 = vld [vmem:[%s503 + $0xc] sm:$0xf]
        %s508 = scalar_lea.vmem %s4, 2
        %v509 = vld [vmem:[%s508] sm:$0x1]
        %v511 = vperm.slane %v509, 0
        %v517 = vunpack.c.l.b16 %v504
        %v518 = vunpack.c.l.b16 %v505
        %v519 = vunpack.c.l.b16 %v506
        %v520 = vunpack.c.l.b16 %v507
        %v521 = vpack.c.b16 %v518, %v517
        %v522 = vpack.c.b16 %v520, %v519
        %v526 = vsel %vm444, %v502, 0
        %528 = vmatpush.bf16.msra.mxu0 0
        %529 = vmatpush.bf16.msra.mxu0 0
        %530 = vmatpush.bf16.msra.mxu0 0
        %531 = vmatpush.bf16.msra.mxu0 0
        %532 = vmatpush.bf16.msra.mxu0 0
        %533 = vmatpush.bf16.msra.mxu0 0
        %534 = vmatpush.bf16.msra.mxu0 %v522
        %535 = vmatpush.bf16.msra.mxu0 %v521
        %536 = vmatmul.bf16.gmra.mxu0 %v526
        %v537 = vpop.f32.mrf.mxu0
        %v538 = vadd.f32 %v511, %v537
        %v539 = vpop.f32.mrf.mxu0
        %540 = vdwg.mxu0
        %s541 = smul.u32 %s33, 8
        %v542 = vlaneseq
        %v543 = vshrl.u32 %v542, 7
        %v544 = vstv %s541
        %v545 = vadd.s32 %v543, %v544
        %v546 = vlaneseq
        %v547 = vand.u32 %v546, 127
        %vm548 = vcmp.gt.s32.totalorder %v547, %v545
        %v549 = vsel %vm548, -1e+09, 0.0
        %v550 = vpack.c.bf16 %v458, %v458
        %v551 = vpack.c.bf16 %v498, %v498
        %v552 = vpack.c.bf16 %v538, %v538
        %vm553 = vcmask 64512
        %v555 = vsel %vm553, %v550, 0
        %v558 = vsel %vm553, %v551, 0
        %560 = vmatpush.bf16.xpose.msra.mxu0 0
        %561 = vmatpush.bf16.xpose.msra.mxu0 0
        %562 = vmatpush.bf16.xpose.msra.mxu0 0
        %563 = vmatpush.bf16.xpose.msra.mxu0 0
        %564 = vmatpush.bf16.xpose.msra.mxu0 0
        %565 = vmatpush.bf16.xpose.msra.mxu0 0
        %566 = vmatpush.bf16.xpose.msra.mxu0 0
        %567 = vmatpush.bf16.xpose.msra.mxu0 %v558
        %568 = vmatmul.bf16.gmra.mxu0 %v555
        %v569 = vpop.f32.mrf.mxu0
        %v570 = vadd.f32 %v549, %v569
        %v571 = vpop.f32.mrf.mxu0
        %572 = vdwg.mxu0
        %v573 = vsel %vm553, %v570, -inf
        %574 = vmax.xlane.f32.xlu0 %v573
        %v575 = vpop.xlane.xlu0 %574
        %v576 = vsub.f32 %v570, %v575
        %v577 = vmul.f32 %v576, 1.442695
        %v578 = vpow.pop %v577
        %v579 = vsel %vm553, %v578, 0.0
        %580 = vadd.xlane.f32.xlu0 %v579
        %v581 = vpop.xlane.xlu0 %580
        %v582 = vrcp.pop %v581
        %v583 = vmul.f32 %v578, %v582
        %v584 = vpack.c.bf16 %v583, %v583
        %v586 = vsel %vm553, %v584, 0
        %vm588 = vcmask 1043456
        %v590 = vsel %vm588, %v552, 0
        %592 = vmatpush.bf16.msra.mxu0 0
        %593 = vmatpush.bf16.msra.mxu0 0
        %594 = vmatpush.bf16.msra.mxu0 0
        %595 = vmatpush.bf16.msra.mxu0 0
        %596 = vmatpush.bf16.msra.mxu0 0
        %597 = vmatpush.bf16.msra.mxu0 0
        %598 = vmatpush.bf16.msra.mxu0 0
        %599 = vmatpush.bf16.msra.mxu0 %v590
        %600 = vmatmul.bf16.gmra.mxu0 %v586
        %v601 = vpop.f32.mrf.mxu0
        %v602 = vadd.f32 0.0, %v601
        %v603 = vpop.f32.mrf.mxu0
        %604 = vdwg.mxu0
        %605 = vst.msk [vmem:[#allocation2] sm:$0xff] %vm553, %v602
        %v607 = vunpack.c.l.b16 %v550
        %v608 = vpack.c.b16 %v607, %v607
        %609 = vrot.lane.b32.xlu0 %v608, 120
        %v610 = vpop.permute.xlu0 %609
        %v612 = vunpack.c.l.b16 %v551
        %v613 = vpack.c.b16 %v612, %v612
        %614 = vrot.lane.b32.xlu0 %v613, 120
        %v615 = vpop.permute.xlu0 %614
        %v617 = vsel %vm553, %v610, 0
        %v620 = vsel %vm553, %v615, 0
        %622 = vmatpush.bf16.xpose.msra.mxu0 0
        %623 = vmatpush.bf16.xpose.msra.mxu0 0
        %624 = vmatpush.bf16.xpose.msra.mxu0 0
        %625 = vmatpush.bf16.xpose.msra.mxu0 0
        %626 = vmatpush.bf16.xpose.msra.mxu0 0
        %627 = vmatpush.bf16.xpose.msra.mxu0 0
        %628 = vmatpush.bf16.xpose.msra.mxu0 0
        %629 = vmatpush.bf16.xpose.msra.mxu0 %v620
        %630 = vmatmul.bf16.gmra.mxu0 %v617
        %v631 = vpop.f32.mrf.mxu0
        %v632 = vadd.f32 %v549, %v631
        %v633 = vpop.f32.mrf.mxu0
        %634 = vdwg.mxu0
        %v635 = vsel %vm553, %v632, -inf
        %636 = vmax.xlane.f32.xlu0 %v635
        %v637 = vpop.xlane.xlu0 %636
        %v638 = vsub.f32 %v632, %v637
        %v639 = vmul.f32 %v638, 1.442695
        %v640 = vpow.pop %v639
        %v641 = vsel %vm553, %v640, 0.0
        %642 = vadd.xlane.f32.xlu0 %v641
        %v643 = vpop.xlane.xlu0 %642
        %v644 = vrcp.pop %v643
        %v645 = vmul.f32 %v640, %v644
        %v646 = vpack.c.bf16 %v645, %v645
        %v648 = vunpack.c.l.b16 %v552
        %v649 = vpack.c.b16 %v648, %v648
        %650 = vrot.lane.b32.xlu0 %v649, 120
        %v651 = vpop.permute.xlu0 %650
        %v653 = vsel %vm553, %v646, 0
        %v656 = vsel %vm588, %v651, 0
        %658 = vmatpush.bf16.msra.mxu0 0
        %659 = vmatpush.bf16.msra.mxu0 0
        %660 = vmatpush.bf16.msra.mxu0 0
        %661 = vmatpush.bf16.msra.mxu0 0
        %662 = vmatpush.bf16.msra.mxu0 0
        %663 = vmatpush.bf16.msra.mxu0 0
        %664 = vmatpush.bf16.msra.mxu0 0
        %665 = vmatpush.bf16.msra.mxu0 %v656
        %666 = vmatmul.bf16.gmra.mxu0 %v653
        %v667 = vpop.f32.mrf.mxu0
        %v668 = vadd.f32 0.0, %v667
        %v669 = vpop.f32.mrf.mxu0
        %670 = vdwg.mxu0
        %672 = vrot.lane.b32.xlu0 %v668, 8
        %v673 = vpop.permute.xlu0 %672
        %vm675 = vcmask 130112
        %676 = vst.msk [vmem:[#allocation2] sm:$0xff] %vm675, %v673
        %677 = vrot.lane.b32.xlu0 %v608, 112
        %v678 = vpop.permute.xlu0 %677
        %679 = vrot.lane.b32.xlu0 %v613, 112
        %v680 = vpop.permute.xlu0 %679
        %v682 = vsel %vm553, %v678, 0
        %v685 = vsel %vm553, %v680, 0
        %687 = vmatpush.bf16.xpose.msra.mxu0 0
        %688 = vmatpush.bf16.xpose.msra.mxu0 0
        %689 = vmatpush.bf16.xpose.msra.mxu0 0
        %690 = vmatpush.bf16.xpose.msra.mxu0 0
        %691 = vmatpush.bf16.xpose.msra.mxu0 0
        %692 = vmatpush.bf16.xpose.msra.mxu0 0
        %693 = vmatpush.bf16.xpose.msra.mxu0 0
        %694 = vmatpush.bf16.xpose.msra.mxu0 %v685
        %695 = vmatmul.bf16.gmra.mxu0 %v682
        %v696 = vpop.f32.mrf.mxu0
        %v697 = vadd.f32 %v549, %v696
        %v698 = vpop.f32.mrf.mxu0
        %699 = vdwg.mxu0
        %v700 = vsel %vm553, %v697, -inf
        %701 = vmax.xlane.f32.xlu0 %v700
        %v702 = vpop.xlane.xlu0 %701
        %v703 = vsub.f32 %v697, %v702
        %v704 = vmul.f32 %v703, 1.442695
        %v705 = vpow.pop %v704
        %v706 = vsel %vm553, %v705, 0.0
        %707 = vadd.xlane.f32.xlu0 %v706
        %v708 = vpop.xlane.xlu0 %707
        %v709 = vrcp.pop %v708
        %v710 = vmul.f32 %v705, %v709
        %v711 = vpack.c.bf16 %v710, %v710
        %712 = vrot.lane.b32.xlu0 %v649, 112
        %v713 = vpop.permute.xlu0 %712
        %v715 = vsel %vm553, %v711, 0
        %v718 = vsel %vm588, %v713, 0
        %720 = vmatpush.bf16.msra.mxu0 0
        %721 = vmatpush.bf16.msra.mxu0 0
        %722 = vmatpush.bf16.msra.mxu0 0
        %723 = vmatpush.bf16.msra.mxu0 0
        %724 = vmatpush.bf16.msra.mxu0 0
        %725 = vmatpush.bf16.msra.mxu0 0
        %726 = vmatpush.bf16.msra.mxu0 0
        %727 = vmatpush.bf16.msra.mxu0 %v718
        %728 = vmatmul.bf16.gmra.mxu0 %v715
        %v729 = vpop.f32.mrf.mxu0
        %v730 = vadd.f32 0.0, %v729
        %v731 = vpop.f32.mrf.mxu0
        %732 = vdwg.mxu0
        %734 = vrot.lane.b32.xlu0 %v730, 16
        %v735 = vpop.permute.xlu0 %734
        %vm737 = vcmask 195712
        %738 = vst.msk [vmem:[#allocation2] sm:$0xff] %vm737, %v735
        %739 = vrot.lane.b32.xlu0 %v608, 104
        %v740 = vpop.permute.xlu0 %739
        %741 = vrot.lane.b32.xlu0 %v613, 104
        %v742 = vpop.permute.xlu0 %741
        %v744 = vsel %vm553, %v740, 0
        %v747 = vsel %vm553, %v742, 0
        %749 = vmatpush.bf16.xpose.msra.mxu0 0
        %750 = vmatpush.bf16.xpose.msra.mxu0 0
        %751 = vmatpush.bf16.xpose.msra.mxu0 0
        %752 = vmatpush.bf16.xpose.msra.mxu0 0
        %753 = vmatpush.bf16.xpose.msra.mxu0 0
        %754 = vmatpush.bf16.xpose.msra.mxu0 0
        %755 = vmatpush.bf16.xpose.msra.mxu0 0
        %756 = vmatpush.bf16.xpose.msra.mxu0 %v747
        %757 = vmatmul.bf16.gmra.mxu0 %v744
        %v758 = vpop.f32.mrf.mxu0
        %v759 = vadd.f32 %v549, %v758
        %v760 = vpop.f32.mrf.mxu0
        %761 = vdwg.mxu0
        %v762 = vsel %vm553, %v759, -inf
        %763 = vmax.xlane.f32.xlu0 %v762
        %v764 = vpop.xlane.xlu0 %763
        %v765 = vsub.f32 %v759, %v764
        %v766 = vmul.f32 %v765, 1.442695
        %v767 = vpow.pop %v766
        %v768 = vsel %vm553, %v767, 0.0
        %769 = vadd.xlane.f32.xlu0 %v768
        %v770 = vpop.xlane.xlu0 %769
        %v771 = vrcp.pop %v770
        %v772 = vmul.f32 %v767, %v771
        %v773 = vpack.c.bf16 %v772, %v772
        %774 = vrot.lane.b32.xlu0 %v649, 104
        %v775 = vpop.permute.xlu0 %774
        %v777 = vsel %vm553, %v773, 0
        %v780 = vsel %vm588, %v775, 0
        %782 = vmatpush.bf16.msra.mxu0 0
        %783 = vmatpush.bf16.msra.mxu0 0
        %784 = vmatpush.bf16.msra.mxu0 0
        %785 = vmatpush.bf16.msra.mxu0 0
        %786 = vmatpush.bf16.msra.mxu0 0
        %787 = vmatpush.bf16.msra.mxu0 0
        %788 = vmatpush.bf16.msra.mxu0 0
        %789 = vmatpush.bf16.msra.mxu0 %v780
        %790 = vmatmul.bf16.gmra.mxu0 %v777
        %v791 = vpop.f32.mrf.mxu0
        %v792 = vadd.f32 0.0, %v791
        %v793 = vpop.f32.mrf.mxu0
        %794 = vdwg.mxu0
        %796 = vrot.lane.b32.xlu0 %v792, 24
        %v797 = vpop.permute.xlu0 %796
        %vm799 = vcmask 261312
        %800 = vst.msk [vmem:[#allocation2] sm:$0xff] %vm799, %v797
        %v801 = vld [vmem:[#allocation2] sm:$0xff]
        %v802 = vpack.c.bf16 %v801, %v801
        %v803 = vld [vmem:[#allocation11] sm:$0xf]
        %v804 = vld [vmem:[#allocation11 + $0x4] sm:$0xf]
        %v805 = vld [vmem:[#allocation11 + $0x8] sm:$0xf]
        %v806 = vld [vmem:[#allocation11 + $0xc] sm:$0xf]
        %v807 = vld [vmem:[%s6] sm:$0x1]
        %v809 = vperm.slane %v807, 0
        %v815 = vunpack.c.l.b16 %v803
        %v816 = vunpack.c.l.b16 %v804
        %v817 = vunpack.c.l.b16 %v805
        %v818 = vunpack.c.l.b16 %v806
        %v819 = vpack.c.b16 %v816, %v815
        %v820 = vpack.c.b16 %v818, %v817
        %v824 = vsel %vm444, %v802, 0
        %826 = vmatpush.bf16.msra.mxu0 0
        %827 = vmatpush.bf16.msra.mxu0 0
        %828 = vmatpush.bf16.msra.mxu0 0
        %829 = vmatpush.bf16.msra.mxu0 0
        %830 = vmatpush.bf16.msra.mxu0 0
        %831 = vmatpush.bf16.msra.mxu0 0
        %832 = vmatpush.bf16.msra.mxu0 %v820
        %833 = vmatpush.bf16.msra.mxu0 %v819
        %834 = vmatmul.bf16.gmra.mxu0 %v824
        %v835 = vpop.f32.mrf.mxu0
        %v836 = vadd.f32 %v809, %v835
        %v837 = vpop.f32.mrf.mxu0
        %838 = vdwg.mxu0
        %839 = vst.msk [vmem:[%s420] sm:$0xff] %vm444, %v836
        %s840 = sand.u32 %s214, 1
        %s841 = scalar_lea.sflag [#allocation5], %s840
        %s842 = sand.u32 %s214, 1
        %s843 = smul.addr %s842, 8
        %s844 = scalar_lea.vmem [#allocation12], %s843
        // Predicated region
        $region69: #{tpu_custom_call.1} parent=47 // pred_check
          %p845 = pneg %p224
        $region70: #{tpu_custom_call.1} parent=47 // pred_check_branch
          %847 = sbr.rel (%p845) target = $region72
        $region71: #{tpu_custom_call.1} parent=47 // pred_region
          %849 = vsyncadd %s841, 0
          %s850 = sadd.s32 %s33, %s32
          %s851 = smul.addr %s850, 8
          %s852 = scalar_lea.hbm %s7, %s851
          %s854 = sshll.u32 %s844, 4
          %s855 = int_to_ptr.vmem [resolvable:$true] %s854
          %s856 = sshll.u32 %s852, 4
          %s857 = int_to_ptr.hbm [resolvable:$true] %s856
          %859 = dma.vmem_to_hbm [thread:$0]  %s855, 128, %s857, %s841
        $region72: #{tpu_custom_call.1} parent=47 // pred_fallthru
          _
      $region48: #{tpu_custom_call.1} parent=5 // pred_fallthru
        _
      %p860 = scmp.le.s32.totalorder 2, %s23
      // Predicated region
      $region73: #{tpu_custom_call.1} parent=5 // pred_check
        %p861 = pneg %p860
      $region74: #{tpu_custom_call.1} parent=5 // pred_check_branch
        %863 = sbr.rel (%p861) target = $region76
      $region75: #{tpu_custom_call.1} parent=5 // pred_region
        %s864 = ssub.s32 %s23, 2
        // Predicated region
        $region77: #{tpu_custom_call.1} parent=75 // pred_check
          %p865 = pneg %p230
        $region78: #{tpu_custom_call.1} parent=75 // pred_check_branch
          %867 = sbr.rel (%p865) target = $region80
        $region79: #{tpu_custom_call.1} parent=75 // pred_region
          %s868 = sand.u32 %s215, 1
          %s869 = scalar_lea.sflag [#allocation5], %s868
          %s870 = sand.u32 %s215, 1
          %s871 = smul.addr %s870, 8
          %s872 = scalar_lea.vmem [#allocation12], %s871
          %874 = dma.done %s869, 128
        $region80: #{tpu_custom_call.1} parent=75 // pred_fallthru
          _
      $region76: #{tpu_custom_call.1} parent=5 // pred_fallthru
        _
    $region6: #{tpu_custom_call.1} parent=1 // loop_footer
      %s27 = sadd.s32 1, %s23
    $region7: #{tpu_custom_call.1} parent=1 // loop_footer_branch
      %22 = sbr.rel target = $region3
    $region8: #{tpu_custom_call.1} parent=1 // loop_exit
      _
    %875 = vsyncpa [#allocation4], 1
    %s876 = scalar_lea.sflag [#allocation4], 1
    %877 = vsyncpa %s876, 1
    %878 = vsyncpa [#allocation7], 1
    %s879 = scalar_lea.sflag [#allocation7], 1
    %880 = vsyncpa %s879, 1
    %881 = vsyncpa [#allocation10], 1
    %882 = vsyncpa [#allocation5], 1
    %s883 = scalar_lea.sflag [#allocation5], 1
    %884 = vsyncpa %s883, 1

// kernel: tpu_custom_call.1
$region0: #{tpu_custom_call.1}
  #allocation0 [shape = 'u32[]', space=smem, size = 0x4, offset = 0x4, fixed_abs, tag = 'smem constant byte address 0x4 - core index']
  #allocation1 [shape = 'u32[72,128]{1,0:T(1,128)}', space=vmem, size = 0x9000, scoped, tag = 'internal scratch']
  #allocation2 [shape = 'f32[8,32]{1,0:T(8,128)}', space=vmem, size = 0x1000, scoped, tag = 'scratch operand']
  %s0 = inlined_call_operand.hbm [shape: f32[2,8,32], index: 0, kind: input, shape index: {}]
  %s1 = inlined_call_operand.hbm [shape: f32[2,8,32], index: 1, kind: input, shape index: {}]
  %s2 = inlined_call_operand.hbm [shape: f32[2,8,32], index: 2, kind: input, shape index: {}]
  %s3 = inlined_call_operand.hbm [shape: bf16[3,32,32], index: 3, kind: input, shape index: {}]
  %s4 = inlined_call_operand.vmem [shape: f32[3,1,32], index: 4, kind: input, shape index: {}]
  %s5 = inlined_call_operand.hbm [shape: bf16[32,32], index: 5, kind: input, shape index: {}]
  %s6 = inlined_call_operand.vmem [shape: f32[1,32], index: 6, kind: input, shape index: {}]
  %s7 = inlined_call_operand.hbm [shape: f32[2,8,32], index: 7, kind: output, shape index: {}]
  %s8 = sld [smem:[#allocation0]]
  $region81: #{tpu_custom_call.1} parent=0
    _
  %s10 = ssub.s32 1, %s8
  %s11 = scalar_select 0, %s10, %s8
  $region1: #{tpu_custom_call.1} parent=0
    #allocation3 [shape = 'u8[8192]{0}', space=vmem, size = 0x2000, scoped, tag = 'input window, operand 0']
    #allocation4 [shape = 's32[2]{0}', space=sflag, size = 0x8, scoped, tag = 'scoped memory for tpu_custom_call.1']
    #allocation5 [shape = 's32[2]{0}', space=sflag, size = 0x8, scoped, tag = 'scoped memory for tpu_custom_call.1']
    #allocation6 [shape = 'u8[8192]{0}', space=vmem, size = 0x2000, scoped, tag = 'input window, operand 1']
    #allocation7 [shape = 's32[2]{0}', space=sflag, size = 0x8, scoped, tag = 'scoped memory for tpu_custom_call.1']
    #allocation8 [shape = 'u8[8192]{0}', space=vmem, size = 0x2000, scoped, tag = 'input window, operand 2']
    #allocation9 [shape = 'u8[24576]{0}', space=vmem, size = 0x6000, scoped, tag = 'input window, operand 3, single buffered']
    #allocation10 [shape = 's32[1]{0}', space=sflag, size = 0x4, scoped, tag = 'scoped memory for tpu_custom_call.1']
    #allocation11 [shape = 'u8[8192]{0}', space=vmem, size = 0x2000, scoped, tag = 'input window, operand 5, single buffered']
    #allocation12 [shape = 'u8[8192]{0}', space=vmem, size = 0x2000, scoped, tag = 'output window, operand 0']
    %12 = vsyncpa [#allocation4], 0
    %s13 = scalar_lea.sflag [#allocation4], 1
    %14 = vsyncpa %s13, 0
    %15 = vsyncpa [#allocation7], 0
    %s16 = scalar_lea.sflag [#allocation7], 1
    %17 = vsyncpa %s16, 0
    %18 = vsyncpa [#allocation10], 0
    %19 = vsyncpa [#allocation5], 0
    %s20 = scalar_lea.sflag [#allocation5], 1
    %21 = vsyncpa %s20, 0
    loop: start=0, step=1, limit=4
    $region2: #{tpu_custom_call.1} parent=1 // loop_pre_header
      _
    $region3: #{tpu_custom_call.1} parent=1 // loop_header
      %s23 = sphi 0, %s27
      %p24 = scmp.ge.s32.totalorder %s23, 4
      %s30 = sphi 0, %s42
      %s31 = sphi 0, %s38
      %s32 = sphi 0, %s30
      %s33 = sphi 0, %s31
      %s34 = sphi 0, %s32
      %s35 = sphi 0, %s33
      %s47 = sphi 0, %s49
      %s50 = sphi 0, %s47
      %s51 = sphi 0, %s50
      %s67 = sphi 0, %s51
      %s73 = sphi 0, %s75
      %s76 = sphi 0, %s73
      %s77 = sphi 0, %s76
      %s93 = sphi 0, %s77
      %s99 = sphi 0, %s101
      %s102 = sphi 0, %s99
      %s103 = sphi 0, %s102
      %s119 = sphi 0, %s103
      %s123 = sphi 0, %s123
      %s125 = sphi 0, %s123
      %s126 = sphi 0, %s125
      %s140 = sphi 0, %s126
      %s144 = sphi 0, %s144
      %s146 = sphi 0, %s144
      %s147 = sphi 0, %s146
      %s161 = sphi 0, %s147
      %s165 = sphi 0, %s165
      %s167 = sphi 0, %s165
      %s168 = sphi 0, %s167
      %s182 = sphi 0, %s168
      %s186 = sphi 0, %s186
      %s188 = sphi 0, %s186
      %s189 = sphi 0, %s188
      %s203 = sphi 0, %s189
      %s211 = sphi 0, %s213
      %s214 = sphi 0, %s211
      %s215 = sphi 0, %s214
      %s231 = sphi 0, %s215
    $region4: #{tpu_custom_call.1} parent=1 // loop_header_branch
      %26 = sbr.rel (%p24) target = $region8
    $region5: #{tpu_custom_call.1} parent=1 // loop_body
      %s28 = ssub.s32 %s23, 1
      %s29 = ssub.s32 %s23, 2
      %s36 = sadd.s32 1, %s31
      %p37 = scmp.ge.s32.totalorder %s36, 1
      %s38 = scalar_select %p37, 0, %s36
      %s39 = sadd.s32 1, %s30
      %s40 = scalar_select %p37, %s39, %s30
      %p41 = scmp.ge.s32.totalorder %s40, 2
      %s42 = scalar_select %p41, 0, %s40
      %s43 = ssub.s32 %s30, %s42
      %s44 = ssub.s32 %s31, %s38
      %s45 = sor.u32 %s43, %s44
      %p46 = scmp.eq.s32.totalorder %s45, 0
      %s48 = sadd.s32 %s47, 1
      %s49 = scalar_select %p46, %s47, %s48
      %p52 = pneg %p46
      %p53 = scmp.eq.s32.totalorder %s23, 1
      %p54 = por %p52, %p53
      %p55 = scmp.ne.s32.totalorder %s47, %s50
      %p56 = scmp.eq.s32.totalorder %s23, 0
      %p57 = por %p55, %p56
      %p58 = scmp.ne.s32.totalorder %s47, %s50
      %p59 = scmp.eq.s32.totalorder %s28, 1
      %p60 = por %p58, %p59
      %p61 = scmp.ne.s32.totalorder %s50, %s51
      %p62 = scmp.eq.s32.totalorder %s28, 0
      %p63 = por %p61, %p62
      %p64 = scmp.ne.s32.totalorder %s50, %s51
      %p65 = scmp.eq.s32.totalorder %s29, 1
      %p66 = por %p64, %p65
      %p68 = scmp.ne.s32.totalorder %s51, %s67
      %p69 = scmp.eq.s32.totalorder %s29, 0
      %p70 = por %p68, %p69
      %s71 = ssub.s32 %s30, %s42
      %p72 = scmp.eq.s32.totalorder %s71, 0
      %s74 = sadd.s32 %s73, 1
      %s75 = scalar_select %p72, %s73, %s74
      %p78 = pneg %p72
      %p79 = scmp.eq.s32.totalorder %s23, 1
      %p80 = por %p78, %p79
      %p81 = scmp.ne.s32.totalorder %s73, %s76
      %p82 = scmp.eq.s32.totalorder %s23, 0
      %p83 = por %p81, %p82
      %p84 = scmp.ne.s32.totalorder %s73, %s76
      %p85 = scmp.eq.s32.totalorder %s28, 1
      %p86 = por %p84, %p85
      %p87 = scmp.ne.s32.totalorder %s76, %s77
      %p88 = scmp.eq.s32.totalorder %s28, 0
      %p89 = por %p87, %p88
      %p90 = scmp.ne.s32.totalorder %s76, %s77
      %p91 = scmp.eq.s32.totalorder %s29, 1
      %p92 = por %p90, %p91
      %p94 = scmp.ne.s32.totalorder %s77, %s93
      %p95 = scmp.eq.s32.totalorder %s29, 0
      %p96 = por %p94, %p95
      %s97 = ssub.s32 %s30, %s42
      %p98 = scmp.eq.s32.totalorder %s97, 0
      %s100 = sadd.s32 %s99, 1
      %s101 = scalar_select %p98, %s99, %s100
      %p104 = pneg %p98
      %p105 = scmp.eq.s32.totalorder %s23, 1
      %p106 = por %p104, %p105
      %p107 = scmp.ne.s32.totalorder %s99, %s102
      %p108 = scmp.eq.s32.totalorder %s23, 0
      %p109 = por %p107, %p108
      %p110 = scmp.ne.s32.totalorder %s99, %s102
      %p111 = scmp.eq.s32.totalorder %s28, 1
      %p112 = por %p110, %p111
      %p113 = scmp.ne.s32.totalorder %s102, %s103
      %p114 = scmp.eq.s32.totalorder %s28, 0
      %p115 = por %p113, %p114
      %p116 = scmp.ne.s32.totalorder %s102, %s103
      %p117 = scmp.eq.s32.totalorder %s29, 1
      %p118 = por %p116, %p117
      %p120 = scmp.ne.s32.totalorder %s103, %s119
      %p121 = scmp.eq.s32.totalorder %s29, 0
      %p122 = por %p120, %p121
      %s124 = sadd.s32 %s123, 1
      %p127 = scmp.eq.s32.totalorder %s23, 1
      %p128 = scmp.ne.s32.totalorder %s123, %s125
      %p129 = scmp.eq.s32.totalorder %s23, 0
      %p130 = por %p128, %p129
      %p131 = scmp.ne.s32.totalorder %s123, %s125
      %p132 = scmp.eq.s32.totalorder %s28, 1
      %p133 = por %p131, %p132
      %p134 = scmp.ne.s32.totalorder %s125, %s126
      %p135 = scmp.eq.s32.totalorder %s28, 0
      %p136 = por %p134, %p135
      %p137 = scmp.ne.s32.totalorder %s125, %s126
      %p138 = scmp.eq.s32.totalorder %s29, 1
      %p139 = por %p137, %p138
      %p141 = scmp.ne.s32.totalorder %s126, %s140
      %p142 = scmp.eq.s32.totalorder %s29, 0
      %p143 = por %p141, %p142
      %s145 = sadd.s32 %s144, 1
      %p148 = scmp.eq.s32.totalorder %s23, 1
      %p149 = scmp.ne.s32.totalorder %s144, %s146
      %p150 = scmp.eq.s32.totalorder %s23, 0
      %p151 = por %p149, %p150
      %p152 = scmp.ne.s32.totalorder %s144, %s146
      %p153 = scmp.eq.s32.totalorder %s28, 1
      %p154 = por %p152, %p153
      %p155 = scmp.ne.s32.totalorder %s146, %s147
      %p156 = scmp.eq.s32.totalorder %s28, 0
      %p157 = por %p155, %p156
      %p158 = scmp.ne.s32.totalorder %s146, %s147
      %p159 = scmp.eq.s32.totalorder %s29, 1
      %p160 = por %p158, %p159
      %p162 = scmp.ne.s32.totalorder %s147, %s161
      %p163 = scmp.eq.s32.totalorder %s29, 0
      %p164 = por %p162, %p163
      %s166 = sadd.s32 %s165, 1
      %p169 = scmp.eq.s32.totalorder %s23, 1
      %p170 = scmp.ne.s32.totalorder %s165, %s167
      %p171 = scmp.eq.s32.totalorder %s23, 0
      %p172 = por %p170, %p171
      %p173 = scmp.ne.s32.totalorder %s165, %s167
      %p174 = scmp.eq.s32.totalorder %s28, 1
      %p175 = por %p173, %p174
      %p176 = scmp.ne.s32.totalorder %s167, %s168
      %p177 = scmp.eq.s32.totalorder %s28, 0
      %p178 = por %p176, %p177
      %p179 = scmp.ne.s32.totalorder %s167, %s168
      %p180 = scmp.eq.s32.totalorder %s29, 1
      %p181 = por %p179, %p180
      %p183 = scmp.ne.s32.totalorder %s168, %s182
      %p184 = scmp.eq.s32.totalorder %s29, 0
      %p185 = por %p183, %p184
      %s187 = sadd.s32 %s186, 1
      %p190 = scmp.eq.s32.totalorder %s23, 1
      %p191 = scmp.ne.s32.totalorder %s186, %s188
      %p192 = scmp.eq.s32.totalorder %s23, 0
      %p193 = por %p191, %p192
      %p194 = scmp.ne.s32.totalorder %s186, %s188
      %p195 = scmp.eq.s32.totalorder %s28, 1
      %p196 = por %p194, %p195
      %p197 = scmp.ne.s32.totalorder %s188, %s189
      %p198 = scmp.eq.s32.totalorder %s28, 0
      %p199 = por %p197, %p198
      %p200 = scmp.ne.s32.totalorder %s188, %s189
      %p201 = scmp.eq.s32.totalorder %s29, 1
      %p202 = por %p200, %p201
      %p204 = scmp.ne.s32.totalorder %s189, %s203
      %p205 = scmp.eq.s32.totalorder %s29, 0
      %p206 = por %p204, %p205
      %s207 = ssub.s32 %s30, %s42
      %s208 = ssub.s32 %s31, %s38
      %s209 = sor.u32 %s207, %s208
      %p210 = scmp.eq.s32.totalorder %s209, 0
      %s212 = sadd.s32 %s211, 1
      %s213 = scalar_select %p210, %s211, %s212
      %p216 = pneg %p210
      %p217 = scmp.eq.s32.totalorder %s23, 1
      %p218 = por %p216, %p217
      %p219 = scmp.ne.s32.totalorder %s211, %s214
      %p220 = scmp.eq.s32.totalorder %s23, 0
      %p221 = por %p219, %p220
      %p222 = scmp.ne.s32.totalorder %s211, %s214
      %p223 = scmp.eq.s32.totalorder %s28, 1
      %p224 = por %p222, %p223
      %p225 = scmp.ne.s32.totalorder %s214, %s215
      %p226 = scmp.eq.s32.totalorder %s28, 0
      %p227 = por %p225, %p226
      %p228 = scmp.ne.s32.totalorder %s214, %s215
      %p229 = scmp.eq.s32.totalorder %s29, 1
      %p230 = por %p228, %p229
      %p232 = scmp.ne.s32.totalorder %s215, %s231
      %p233 = scmp.eq.s32.totalorder %s29, 0
      %p234 = por %p232, %p233
      %p235 = scmp.le.s32.totalorder 1, %s23
      %p236 = scmp.lt.s32.totalorder %s23, 3
      %p237 = pnand %p235, %p236
      %p238 = pneg %p237
      // Predicated region
      $region9: #{tpu_custom_call.1} parent=5 // pred_check
        _
      $region10: #{tpu_custom_call.1} parent=5 // pred_check_branch
        %240 = sbr.rel (%p237) target = $region12
      $region11: #{tpu_custom_call.1} parent=5 // pred_region
        %s241 = ssub.s32 %s23, 1
        // Predicated region
        $region13: #{tpu_custom_call.1} parent=11 // pred_check
          %p242 = pneg %p136
        $region14: #{tpu_custom_call.1} parent=11 // pred_check_branch
          %244 = sbr.rel (%p242) target = $region16
        $region15: #{tpu_custom_call.1} parent=11 // pred_region
          %246 = vsyncadd [#allocation10], 0
          %s247 = sshll.u32 %s3, 4
          %s248 = int_to_ptr.hbm [resolvable:$true] %s247
          %s249 = sshll.u32 [#allocation9], 4
          %s250 = int_to_ptr.vmem [resolvable:$true] %s249
          %255 = dma.hbm_to_vmem [thread:$0]  %s248, 768, %s250, [#allocation10], 64, 64, 4
        $region16: #{tpu_custom_call.1} parent=11 // pred_fallthru
          _
        // Predicated region
        $region17: #{tpu_custom_call.1} parent=11 // pred_check
          %p256 = pneg %p157
        $region18: #{tpu_custom_call.1} parent=11 // pred_check_branch
          %258 = sbr.rel (%p256) target = $region20
        $region19: #{tpu_custom_call.1} parent=11 // pred_region
          _
        $region20: #{tpu_custom_call.1} parent=11 // pred_fallthru
          _
        // Predicated region
        $region21: #{tpu_custom_call.1} parent=11 // pred_check
          %p259 = pneg %p178
        $region22: #{tpu_custom_call.1} parent=11 // pred_check_branch
          %261 = sbr.rel (%p259) target = $region24
        $region23: #{tpu_custom_call.1} parent=11 // pred_region
          %263 = vsyncadd [#allocation10], 0
          %s264 = sshll.u32 %s5, 4
          %s265 = int_to_ptr.hbm [resolvable:$true] %s264
          %s266 = sshll.u32 [#allocation11], 4
          %s267 = int_to_ptr.vmem [resolvable:$true] %s266
          %272 = dma.hbm_to_vmem [thread:$0]  %s265, 256, %s267, [#allocation10], 64, 64, 4
        $region24: #{tpu_custom_call.1} parent=11 // pred_fallthru
          _
        // Predicated region
        $region25: #{tpu_custom_call.1} parent=11 // pred_check
          %p273 = pneg %p199
        $region26: #{tpu_custom_call.1} parent=11 // pred_check_branch
          %275 = sbr.rel (%p273) target = $region28
        $region27: #{tpu_custom_call.1} parent=11 // pred_region
          _
        $region28: #{tpu_custom_call.1} parent=11 // pred_fallthru
          _
      $region12: #{tpu_custom_call.1} parent=5 // pred_fallthru
        _
      %p276 = scmp.lt.s32.totalorder %s23, 2
      // Predicated region
      $region29: #{tpu_custom_call.1} parent=5 // pred_check
        %p277 = pneg %p276
      $region30: #{tpu_custom_call.1} parent=5 // pred_check_branch
        %279 = sbr.rel (%p277) target = $region32
      $region31: #{tpu_custom_call.1} parent=5 // pred_region
        // Predicated region
        $region33: #{tpu_custom_call.1} parent=31 // pred_check
          %p280 = pneg %p57
        $region34: #{tpu_custom_call.1} parent=31 // pred_check_branch
          %282 = sbr.rel (%p280) target = $region36
        $region35: #{tpu_custom_call.1} parent=31 // pred_region
          %s283 = sand.u32 %s47, 1
          %s284 = scalar_lea.sflag [#allocation4], %s283
          %s285 = sand.u32 %s47, 1
          %s286 = smul.addr %s285, 8
          %s287 = scalar_lea.vmem [#allocation3], %s286
          %289 = vsyncadd %s284, 0
          %s290 = sadd.s32 %s31, %s30
          %s291 = smul.addr %s290, 8
          %s292 = scalar_lea.hbm %s0, %s291
          %s294 = sshll.u32 %s292, 4
          %s295 = int_to_ptr.hbm [resolvable:$true] %s294
          %s296 = sshll.u32 %s287, 4
          %s297 = int_to_ptr.vmem [resolvable:$true] %s296
          %299 = dma.hbm_to_vmem [thread:$0]  %s295, 128, %s297, %s284
        $region36: #{tpu_custom_call.1} parent=31 // pred_fallthru
          _
        // Predicated region
        $region37: #{tpu_custom_call.1} parent=31 // pred_check
          %p300 = pneg %p83
        $region38: #{tpu_custom_call.1} parent=31 // pred_check_branch
          %302 = sbr.rel (%p300) target = $region40
        $region39: #{tpu_custom_call.1} parent=31 // pred_region
          %s303 = sand.u32 %s23, 1
          %s304 = scalar_lea.sflag [#allocation7], %s303
          %s305 = sand.u32 %s73, 1
          %s306 = smul.addr %s305, 8
          %s307 = scalar_lea.vmem [#allocation6], %s306
          %309 = vsyncadd %s304, 0
          %s310 = smul.addr %s30, 8
          %s311 = scalar_lea.hbm %s1, %s310
          %s313 = sshll.u32 %s311, 4
          %s314 = int_to_ptr.hbm [resolvable:$true] %s313
          %s315 = sshll.u32 %s307, 4
          %s316 = int_to_ptr.vmem [resolvable:$true] %s315
          %318 = dma.hbm_to_vmem [thread:$0]  %s314, 128, %s316, %s304
        $region40: #{tpu_custom_call.1} parent=31 // pred_fallthru
          _
        // Predicated region
        $region41: #{tpu_custom_call.1} parent=31 // pred_check
          %p319 = pneg %p109
        $region42: #{tpu_custom_call.1} parent=31 // pred_check_branch
          %321 = sbr.rel (%p319) target = $region44
        $region43: #{tpu_custom_call.1} parent=31 // pred_region
          %s322 = sand.u32 %s23, 1
          %s323 = scalar_lea.sflag [#allocation7], %s322
          %s324 = sand.u32 %s99, 1
          %s325 = smul.addr %s324, 8
          %s326 = scalar_lea.vmem [#allocation8], %s325
          %328 = vsyncadd %s323, 0
          %s329 = smul.addr %s30, 8
          %s330 = scalar_lea.hbm %s2, %s329
          %s332 = sshll.u32 %s330, 4
          %s333 = int_to_ptr.hbm [resolvable:$true] %s332
          %s334 = sshll.u32 %s326, 4
          %s335 = int_to_ptr.vmem [resolvable:$true] %s334
          %337 = dma.hbm_to_vmem [thread:$0]  %s333, 128, %s335, %s323
        $region44: #{tpu_custom_call.1} parent=31 // pred_fallthru
          _
      $region32: #{tpu_custom_call.1} parent=5 // pred_fallthru
        _
      %p338 = scmp.le.s32.totalorder 1, %s23
      %p339 = scmp.lt.s32.totalorder %s23, 3
      %p340 = pnand %p338, %p339
      %p341 = pneg %p340
      // Predicated region
      $region45: #{tpu_custom_call.1} parent=5 // pred_check
        _
      $region46: #{tpu_custom_call.1} parent=5 // pred_check_branch
        %343 = sbr.rel (%p340) target = $region48
      $region47: #{tpu_custom_call.1} parent=5 // pred_region
        %s344 = ssub.s32 %s23, 1
        %s345 = sand.u32 %s50, 1
        %s346 = scalar_lea.sflag [#allocation4], %s345
        %s347 = sand.u32 %s50, 1
        %s348 = smul.addr %s347, 8
        %s349 = scalar_lea.vmem [#allocation3], %s348
        // Predicated region
        $region49: #{tpu_custom_call.1} parent=47 // pred_check
          %p350 = pneg %p63
        $region50: #{tpu_custom_call.1} parent=47 // pred_check_branch
          %352 = sbr.rel (%p350) target = $region52
        $region51: #{tpu_custom_call.1} parent=47 // pred_region
          %354 = dma.done %s346, 128
        $region52: #{tpu_custom_call.1} parent=47 // pred_fallthru
          _
        %s355 = sand.u32 %s28, 1
        %s356 = scalar_lea.sflag [#allocation7], %s355
        %s357 = sand.u32 %s76, 1
        %s358 = smul.addr %s357, 8
        %s359 = scalar_lea.vmem [#allocation6], %s358
        // Predicated region
        $region53: #{tpu_custom_call.1} parent=47 // pred_check
          %p360 = pneg %p89
        $region54: #{tpu_custom_call.1} parent=47 // pred_check_branch
          %362 = sbr.rel (%p360) target = $region56
        $region55: #{tpu_custom_call.1} parent=47 // pred_region
          %364 = dma.done %s356, 128
        $region56: #{tpu_custom_call.1} parent=47 // pred_fallthru
          _
        %s365 = sand.u32 %s28, 1
        %s366 = scalar_lea.sflag [#allocation7], %s365
        %s367 = sand.u32 %s102, 1
        %s368 = smul.addr %s367, 8
        %s369 = scalar_lea.vmem [#allocation8], %s368
        // Predicated region
        $region57: #{tpu_custom_call.1} parent=47 // pred_check
          %p370 = pneg %p115
        $region58: #{tpu_custom_call.1} parent=47 // pred_check_branch
          %372 = sbr.rel (%p370) target = $region60
        $region59: #{tpu_custom_call.1} parent=47 // pred_region
          %374 = dma.done %s366, 128
        $region60: #{tpu_custom_call.1} parent=47 // pred_fallthru
          _
        // Predicated region
        $region61: #{tpu_custom_call.1} parent=47 // pred_check
          %p375 = pneg %p136
        $region62: #{tpu_custom_call.1} parent=47 // pred_check_branch
          %377 = sbr.rel (%p375) target = $region64
        $region63: #{tpu_custom_call.1} parent=47 // pred_region
          %379 = dma.done [#allocation10], 768
        $region64: #{tpu_custom_call.1} parent=47 // pred_fallthru
          _
        // Predicated region
        $region65: #{tpu_custom_call.1} parent=47 // pred_check
          %p380 = pneg %p178
        $region66: #{tpu_custom_call.1} parent=47 // pred_check_branch
          %382 = sbr.rel (%p380) target = $region68
        $region67: #{tpu_custom_call.1} parent=47 // pred_region
          %384 = dma.done [#allocation10], 256
        $region68: #{tpu_custom_call.1} parent=47 // pred_fallthru
          _
        %s385 = sand.u32 %s50, 1
        %s386 = scalar_lea.sflag [#allocation4], %s385
        %s387 = sand.u32 %s50, 1
        %s388 = smul.addr %s387, 8
        %s389 = scalar_lea.vmem [#allocation3], %s388
        %p390 = pneg %p63
        %p391 = pneg %p60
        %s392 = sand.u32 %s28, 1
        %s393 = scalar_lea.sflag [#allocation7], %s392
        %s394 = sand.u32 %s76, 1
        %s395 = smul.addr %s394, 8
        %s396 = scalar_lea.vmem [#allocation6], %s395
        %p397 = pneg %p89
        %p398 = pneg %p86
        %s399 = sand.u32 %s28, 1
        %s400 = scalar_lea.sflag [#allocation7], %s399
        %s401 = sand.u32 %s102, 1
        %s402 = smul.addr %s401, 8
        %s403 = scalar_lea.vmem [#allocation8], %s402
        %p404 = pneg %p115
        %p405 = pneg %p112
        %p406 = pneg %p136
        %p407 = pneg %p133
        %p408 = pneg %p157
        %p409 = pneg %p154
        %p410 = pneg %p178
        %p411 = pneg %p175
        %p412 = pneg %p199
        %p413 = pneg %p196
        %p414 = pneg %p227
        %p415 = pneg %p224
        %s416 = sand.u32 %s214, 1
        %s417 = scalar_lea.sflag [#allocation5], %s416
        %s418 = sand.u32 %s214, 1
        %s419 = smul.addr %s418, 8
        %s420 = scalar_lea.vmem [#allocation12], %s419
        %v422 = vld [vmem:[%s349] sm:$0xff]
        %v423 = vpack.c.bf16 %v422, %v422
        %v424 = vld [vmem:[#allocation9] sm:$0xf]
        %v425 = vld [vmem:[#allocation9 + $0x4] sm:$0xf]
        %v426 = vld [vmem:[#allocation9 + $0x8] sm:$0xf]
        %v427 = vld [vmem:[#allocation9 + $0xc] sm:$0xf]
        %v428 = vld [vmem:[%s4] sm:$0x1]
        %v430 = vperm.slane %v428, 0
        %v436 = vunpack.c.l.b16 %v424
        %v437 = vunpack.c.l.b16 %v425
        %v438 = vunpack.c.l.b16 %v426
        %v439 = vunpack.c.l.b16 %v427
        %v440 = vpack.c.b16 %v437, %v436
        %v441 = vpack.c.b16 %v439, %v438
        %vm444 = vcmask 261120
        %v446 = vsel %vm444, %v423, 0
        %448 = vmatpush.bf16.msra.mxu0 0
        %449 = vmatpush.bf16.msra.mxu0 0
        %450 = vmatpush.bf16.msra.mxu0 0
        %451 = vmatpush.bf16.msra.mxu0 0
        %452 = vmatpush.bf16.msra.mxu0 0
        %453 = vmatpush.bf16.msra.mxu0 0
        %454 = vmatpush.bf16.msra.mxu0 %v441
        %455 = vmatpush.bf16.msra.mxu0 %v440
        %456 = vmatmul.bf16.gmra.mxu0 %v446
        %v457 = vpop.f32.mrf.mxu0
        %v458 = vadd.f32 %v430, %v457
        %v459 = vpop.f32.mrf.mxu0
        %460 = vdwg.mxu0
        %v461 = vld [vmem:[%s359] sm:$0xff]
        %v462 = vpack.c.bf16 %v461, %v461
        %s463 = scalar_lea.vmem [#allocation9], 16
        %v464 = vld [vmem:[%s463] sm:$0xf]
        %v465 = vld [vmem:[%s463 + $0x4] sm:$0xf]
        %v466 = vld [vmem:[%s463 + $0x8] sm:$0xf]
        %v467 = vld [vmem:[%s463 + $0xc] sm:$0xf]
        %s468 = scalar_lea.vmem %s4, 1
        %v469 = vld [vmem:[%s468] sm:$0x1]
        %v471 = vperm.slane %v469, 0
        %v477 = vunpack.c.l.b16 %v464
        %v478 = vunpack.c.l.b16 %v465
        %v479 = vunpack.c.l.b16 %v466
        %v480 = vunpack.c.l.b16 %v467
        %v481 = vpack.c.b16 %v478, %v477
        %v482 = vpack.c.b16 %v480, %v479
        %v486 = vsel %vm444, %v462, 0
        %488 = vmatpush.bf16.msra.mxu0 0
        %489 = vmatpush.bf16.msra.mxu0 0
        %490 = vmatpush.bf16.msra.mxu0 0
        %491 = vmatpush.bf16.msra.mxu0 0
        %492 = vmatpush.bf16.msra.mxu0 0
        %493 = vmatpush.bf16.msra.mxu0 0
        %494 = vmatpush.bf16.msra.mxu0 %v482
        %495 = vmatpush.bf16.msra.mxu0 %v481
        %496 = vmatmul.bf16.gmra.mxu0 %v486
        %v497 = vpop.f32.mrf.mxu0
        %v498 = vadd.f32 %v471, %v497
        %v499 = vpop.f32.mrf.mxu0
        %500 = vdwg.mxu0
        %v501 = vld [vmem:[%s369] sm:$0xff]
        %v502 = vpack.c.bf16 %v501, %v501
        %s503 = scalar_lea.vmem [#allocation9], 32
        %v504 = vld [vmem:[%s503] sm:$0xf]
        %v505 = vld [vmem:[%s503 + $0x4] sm:$0xf]
        %v506 = vld [vmem:[%s503 + $0x8] sm:$0xf]
        %v507 = vld [vmem:[%s503 + $0xc] sm:$0xf]
        %s508 = scalar_lea.vmem %s4, 2
        %v509 = vld [vmem:[%s508] sm:$0x1]
        %v511 = vperm.slane %v509, 0
        %v517 = vunpack.c.l.b16 %v504
        %v518 = vunpack.c.l.b16 %v505
        %v519 = vunpack.c.l.b16 %v506
        %v520 = vunpack.c.l.b16 %v507
        %v521 = vpack.c.b16 %v518, %v517
        %v522 = vpack.c.b16 %v520, %v519
        %v526 = vsel %vm444, %v502, 0
        %528 = vmatpush.bf16.msra.mxu0 0
        %529 = vmatpush.bf16.msra.mxu0 0
        %530 = vmatpush.bf16.msra.mxu0 0
        %531 = vmatpush.bf16.msra.mxu0 0
        %532 = vmatpush.bf16.msra.mxu0 0
        %533 = vmatpush.bf16.msra.mxu0 0
        %534 = vmatpush.bf16.msra.mxu0 %v522
        %535 = vmatpush.bf16.msra.mxu0 %v521
        %536 = vmatmul.bf16.gmra.mxu0 %v526
        %v537 = vpop.f32.mrf.mxu0
        %v538 = vadd.f32 %v511, %v537
        %v539 = vpop.f32.mrf.mxu0
        %540 = vdwg.mxu0
        %s541 = smul.u32 %s33, 8
        %v542 = vlaneseq
        %v543 = vshrl.u32 %v542, 7
        %v544 = vstv %s541
        %v545 = vadd.s32 %v543, %v544
        %v546 = vlaneseq
        %v547 = vand.u32 %v546, 127
        %vm548 = vcmp.gt.s32.totalorder %v547, %v545
        %v549 = vsel %vm548, -1e+09, 0.0
        %v550 = vpack.c.bf16 %v458, %v458
        %v551 = vpack.c.bf16 %v498, %v498
        %v552 = vpack.c.bf16 %v538, %v538
        %vm553 = vcmask 64512
        %v555 = vsel %vm553, %v550, 0
        %v558 = vsel %vm553, %v551, 0
        %560 = vmatpush.bf16.xpose.msra.mxu0 0
        %561 = vmatpush.bf16.xpose.msra.mxu0 0
        %562 = vmatpush.bf16.xpose.msra.mxu0 0
        %563 = vmatpush.bf16.xpose.msra.mxu0 0
        %564 = vmatpush.bf16.xpose.msra.mxu0 0
        %565 = vmatpush.bf16.xpose.msra.mxu0 0
        %566 = vmatpush.bf16.xpose.msra.mxu0 0
        %567 = vmatpush.bf16.xpose.msra.mxu0 %v558
        %568 = vmatmul.bf16.gmra.mxu0 %v555
        %v569 = vpop.f32.mrf.mxu0
        %v570 = vadd.f32 %v549, %v569
        %v571 = vpop.f32.mrf.mxu0
        %572 = vdwg.mxu0
        %v573 = vsel %vm553, %v570, -inf
        %574 = vmax.xlane.f32.xlu0 %v573
        %v575 = vpop.xlane.xlu0 %574
        %v576 = vsub.f32 %v570, %v575
        %v577 = vmul.f32 %v576, 1.442695
        %v578 = vpow.pop %v577
        %v579 = vsel %vm553, %v578, 0.0
        %580 = vadd.xlane.f32.xlu0 %v579
        %v581 = vpop.xlane.xlu0 %580
        %v582 = vrcp.pop %v581
        %v583 = vmul.f32 %v578, %v582
        %v584 = vpack.c.bf16 %v583, %v583
        %v586 = vsel %vm553, %v584, 0
        %vm588 = vcmask 1043456
        %v590 = vsel %vm588, %v552, 0
        %592 = vmatpush.bf16.msra.mxu0 0
        %593 = vmatpush.bf16.msra.mxu0 0
        %594 = vmatpush.bf16.msra.mxu0 0
        %595 = vmatpush.bf16.msra.mxu0 0
        %596 = vmatpush.bf16.msra.mxu0 0
        %597 = vmatpush.bf16.msra.mxu0 0
        %598 = vmatpush.bf16.msra.mxu0 0
        %599 = vmatpush.bf16.msra.mxu0 %v590
        %600 = vmatmul.bf16.gmra.mxu0 %v586
        %v601 = vpop.f32.mrf.mxu0
        %v602 = vadd.f32 0.0, %v601
        %v603 = vpop.f32.mrf.mxu0
        %604 = vdwg.mxu0
        %605 = vst.msk [vmem:[#allocation2] sm:$0xff] %vm553, %v602
        %v607 = vunpack.c.l.b16 %v550
        %v608 = vpack.c.b16 %v607, %v607
        %609 = vrot.lane.b32.xlu0 %v608, 120
        %v610 = vpop.permute.xlu0 %609
        %v612 = vunpack.c.l.b16 %v551
        %v613 = vpack.c.b16 %v612, %v612
        %614 = vrot.lane.b32.xlu0 %v613, 120
        %v615 = vpop.permute.xlu0 %614
        %v617 = vsel %vm553, %v610, 0
        %v620 = vsel %vm553, %v615, 0
        %622 = vmatpush.bf16.xpose.msra.mxu0 0
        %623 = vmatpush.bf16.xpose.msra.mxu0 0
        %624 = vmatpush.bf16.xpose.msra.mxu0 0
        %625 = vmatpush.bf16.xpose.msra.mxu0 0
        %626 = vmatpush.bf16.xpose.msra.mxu0 0
        %627 = vmatpush.bf16.xpose.msra.mxu0 0
        %628 = vmatpush.bf16.xpose.msra.mxu0 0
        %629 = vmatpush.bf16.xpose.msra.mxu0 %v620
        %630 = vmatmul.bf16.gmra.mxu0 %v617
        %v631 = vpop.f32.mrf.mxu0
        %v632 = vadd.f32 %v549, %v631
        %v633 = vpop.f32.mrf.mxu0
        %634 = vdwg.mxu0
        %v635 = vsel %vm553, %v632, -inf
        %636 = vmax.xlane.f32.xlu0 %v635
        %v637 = vpop.xlane.xlu0 %636
        %v638 = vsub.f32 %v632, %v637
        %v639 = vmul.f32 %v638, 1.442695
        %v640 = vpow.pop %v639
        %v641 = vsel %vm553, %v640, 0.0
        %642 = vadd.xlane.f32.xlu0 %v641
        %v643 = vpop.xlane.xlu0 %642
        %v644 = vrcp.pop %v643
        %v645 = vmul.f32 %v640, %v644
        %v646 = vpack.c.bf16 %v645, %v645
        %v648 = vunpack.c.l.b16 %v552
        %v649 = vpack.c.b16 %v648, %v648
        %650 = vrot.lane.b32.xlu0 %v649, 120
        %v651 = vpop.permute.xlu0 %650
        %v653 = vsel %vm553, %v646, 0
        %v656 = vsel %vm588, %v651, 0
        %658 = vmatpush.bf16.msra.mxu0 0
        %659 = vmatpush.bf16.msra.mxu0 0
        %660 = vmatpush.bf16.msra.mxu0 0
        %661 = vmatpush.bf16.msra.mxu0 0
        %662 = vmatpush.bf16.msra.mxu0 0
        %663 = vmatpush.bf16.msra.mxu0 0
        %664 = vmatpush.bf16.msra.mxu0 0
        %665 = vmatpush.bf16.msra.mxu0 %v656
        %666 = vmatmul.bf16.gmra.mxu0 %v653
        %v667 = vpop.f32.mrf.mxu0
        %v668 = vadd.f32 0.0, %v667
        %v669 = vpop.f32.mrf.mxu0
        %670 = vdwg.mxu0
        %672 = vrot.lane.b32.xlu0 %v668, 8
        %v673 = vpop.permute.xlu0 %672
        %vm675 = vcmask 130112
        %676 = vst.msk [vmem:[#allocation2] sm:$0xff] %vm675, %v673
        %677 = vrot.lane.b32.xlu0 %v608, 112
        %v678 = vpop.permute.xlu0 %677
        %679 = vrot.lane.b32.xlu0 %v613, 112
        %v680 = vpop.permute.xlu0 %679
        %v682 = vsel %vm553, %v678, 0
        %v685 = vsel %vm553, %v680, 0
        %687 = vmatpush.bf16.xpose.msra.mxu0 0
        %688 = vmatpush.bf16.xpose.msra.mxu0 0
        %689 = vmatpush.bf16.xpose.msra.mxu0 0
        %690 = vmatpush.bf16.xpose.msra.mxu0 0
        %691 = vmatpush.bf16.xpose.msra.mxu0 0
        %692 = vmatpush.bf16.xpose.msra.mxu0 0
        %693 = vmatpush.bf16.xpose.msra.mxu0 0
        %694 = vmatpush.bf16.xpose.msra.mxu0 %v685
        %695 = vmatmul.bf16.gmra.mxu0 %v682
        %v696 = vpop.f32.mrf.mxu0
        %v697 = vadd.f32 %v549, %v696
        %v698 = vpop.f32.mrf.mxu0
        %699 = vdwg.mxu0
        %v700 = vsel %vm553, %v697, -inf
        %701 = vmax.xlane.f32.xlu0 %v700
        %v702 = vpop.xlane.xlu0 %701
        %v703 = vsub.f32 %v697, %v702
        %v704 = vmul.f32 %v703, 1.442695
        %v705 = vpow.pop %v704
        %v706 = vsel %vm553, %v705, 0.0
        %707 = vadd.xlane.f32.xlu0 %v706
        %v708 = vpop.xlane.xlu0 %707
        %v709 = vrcp.pop %v708
        %v710 = vmul.f32 %v705, %v709
        %v711 = vpack.c.bf16 %v710, %v710
        %712 = vrot.lane.b32.xlu0 %v649, 112
        %v713 = vpop.permute.xlu0 %712
        %v715 = vsel %vm553, %v711, 0
        %v718 = vsel %vm588, %v713, 0
        %720 = vmatpush.bf16.msra.mxu0 0
        %721 = vmatpush.bf16.msra.mxu0 0
        %722 = vmatpush.bf16.msra.mxu0 0
        %723 = vmatpush.bf16.msra.mxu0 0
        %724 = vmatpush.bf16.msra.mxu0 0
        %725 = vmatpush.bf16.msra.mxu0 0
        %726 = vmatpush.bf16.msra.mxu0 0
        %727 = vmatpush.bf16.msra.mxu0 %v718
        %728 = vmatmul.bf16.gmra.mxu0 %v715
        %v729 = vpop.f32.mrf.mxu0
        %v730 = vadd.f32 0.0, %v729
        %v731 = vpop.f32.mrf.mxu0
        %732 = vdwg.mxu0
        %734 = vrot.lane.b32.xlu0 %v730, 16
        %v735 = vpop.permute.xlu0 %734
        %vm737 = vcmask 195712
        %738 = vst.msk [vmem:[#allocation2] sm:$0xff] %vm737, %v735
        %739 = vrot.lane.b32.xlu0 %v608, 104
        %v740 = vpop.permute.xlu0 %739
        %741 = vrot.lane.b32.xlu0 %v613, 104
        %v742 = vpop.permute.xlu0 %741
        %v744 = vsel %vm553, %v740, 0
        %v747 = vsel %vm553, %v742, 0
        %749 = vmatpush.bf16.xpose.msra.mxu0 0
        %750 = vmatpush.bf16.xpose.msra.mxu0 0
        %751 = vmatpush.bf16.xpose.msra.mxu0 0
        %752 = vmatpush.bf16.xpose.msra.mxu0 0
        %753 = vmatpush.bf16.xpose.msra.mxu0 0
        %754 = vmatpush.bf16.xpose.msra.mxu0 0
        %755 = vmatpush.bf16.xpose.msra.mxu0 0
        %756 = vmatpush.bf16.xpose.msra.mxu0 %v747
        %757 = vmatmul.bf16.gmra.mxu0 %v744
        %v758 = vpop.f32.mrf.mxu0
        %v759 = vadd.f32 %v549, %v758
        %v760 = vpop.f32.mrf.mxu0
        %761 = vdwg.mxu0
        %v762 = vsel %vm553, %v759, -inf
        %763 = vmax.xlane.f32.xlu0 %v762
        %v764 = vpop.xlane.xlu0 %763
        %v765 = vsub.f32 %v759, %v764
        %v766 = vmul.f32 %v765, 1.442695
        %v767 = vpow.pop %v766
        %v768 = vsel %vm553, %v767, 0.0
        %769 = vadd.xlane.f32.xlu0 %v768
        %v770 = vpop.xlane.xlu0 %769
        %v771 = vrcp.pop %v770
        %v772 = vmul.f32 %v767, %v771
        %v773 = vpack.c.bf16 %v772, %v772
        %774 = vrot.lane.b32.xlu0 %v649, 104
        %v775 = vpop.permute.xlu0 %774
        %v777 = vsel %vm553, %v773, 0
        %v780 = vsel %vm588, %v775, 0
        %782 = vmatpush.bf16.msra.mxu0 0
        %783 = vmatpush.bf16.msra.mxu0 0
        %784 = vmatpush.bf16.msra.mxu0 0
        %785 = vmatpush.bf16.msra.mxu0 0
        %786 = vmatpush.bf16.msra.mxu0 0
        %787 = vmatpush.bf16.msra.mxu0 0
        %788 = vmatpush.bf16.msra.mxu0 0
        %789 = vmatpush.bf16.msra.mxu0 %v780
        %790 = vmatmul.bf16.gmra.mxu0 %v777
        %v791 = vpop.f32.mrf.mxu0
        %v792 = vadd.f32 0.0, %v791
        %v793 = vpop.f32.mrf.mxu0
        %794 = vdwg.mxu0
        %796 = vrot.lane.b32.xlu0 %v792, 24
        %v797 = vpop.permute.xlu0 %796
        %vm799 = vcmask 261312
        %800 = vst.msk [vmem:[#allocation2] sm:$0xff] %vm799, %v797
        %v801 = vld [vmem:[#allocation2] sm:$0xff]
        %v802 = vpack.c.bf16 %v801, %v801
        %v803 = vld [vmem:[#allocation11] sm:$0xf]
        %v804 = vld [vmem:[#allocation11 + $0x4] sm:$0xf]
        %v805 = vld [vmem:[#allocation11 + $0x8] sm:$0xf]
        %v806 = vld [vmem:[#allocation11 + $0xc] sm:$0xf]
        %v807 = vld [vmem:[%s6] sm:$0x1]
        %v809 = vperm.slane %v807, 0
        %v815 = vunpack.c.l.b16 %v803
        %v816 = vunpack.c.l.b16 %v804
        %v817 = vunpack.c.l.b16 %v805
        %v818 = vunpack.c.l.b16 %v806
        %v819 = vpack.c.b16 %v816, %v815
        %v820 = vpack.c.b16 %v818, %v817
        %v824 = vsel %vm444, %v802, 0
        %826 = vmatpush.bf16.msra.mxu0 0
        %827 = vmatpush.bf16.msra.mxu0 0
        %828 = vmatpush.bf16.msra.mxu0 0
        %829 = vmatpush.bf16.msra.mxu0 0
        %830 = vmatpush.bf16.msra.mxu0 0
        %831 = vmatpush.bf16.msra.mxu0 0
        %832 = vmatpush.bf16.msra.mxu0 %v820
        %833 = vmatpush.bf16.msra.mxu0 %v819
        %834 = vmatmul.bf16.gmra.mxu0 %v824
        %v835 = vpop.f32.mrf.mxu0
        %v836 = vadd.f32 %v809, %v835
        %v837 = vpop.f32.mrf.mxu0
        %838 = vdwg.mxu0
        %839 = vst.msk [vmem:[%s420] sm:$0xff] %vm444, %v836
        %s840 = sand.u32 %s214, 1
        %s841 = scalar_lea.sflag [#allocation5], %s840
        %s842 = sand.u32 %s214, 1
        %s843 = smul.addr %s842, 8
        %s844 = scalar_lea.vmem [#allocation12], %s843
        // Predicated region
        $region69: #{tpu_custom_call.1} parent=47 // pred_check
          %p845 = pneg %p224
        $region70: #{tpu_custom_call.1} parent=47 // pred_check_branch
          %847 = sbr.rel (%p845) target = $region72
        $region71: #{tpu_custom_call.1} parent=47 // pred_region
          %849 = vsyncadd %s841, 0
          %s850 = sadd.s32 %s33, %s32
          %s851 = smul.addr %s850, 8
          %s852 = scalar_lea.hbm %s7, %s851
          %s854 = sshll.u32 %s844, 4
          %s855 = int_to_ptr.vmem [resolvable:$true] %s854
          %s856 = sshll.u32 %s852, 4
          %s857 = int_to_ptr.hbm [resolvable:$true] %s856
          %859 = dma.vmem_to_hbm [thread:$0]  %s855, 128, %s857, %s841
        $region72: #{tpu_custom_call.1} parent=47 // pred_fallthru
          _
      $region48: #{tpu_custom_call.1} parent=5 // pred_fallthru
        _
      %p860 = scmp.le.s32.totalorder 2, %s23
      // Predicated region
      $region73: #{tpu_custom_call.1} parent=5 // pred_check
        %p861 = pneg %p860
      $region74: #{tpu_custom_call.1} parent=5 // pred_check_branch
        %863 = sbr.rel (%p861) target = $region76
      $region75: #{tpu_custom_call.1} parent=5 // pred_region
        %s864 = ssub.s32 %s23, 2
        // Predicated region
        $region77: #{tpu_custom_call.1} parent=75 // pred_check
          %p865 = pneg %p230
        $region78: #{tpu_custom_call.1} parent=75 // pred_check_branch
          %867 = sbr.rel (%p865) target = $region80
        $region79: #{tpu_custom_call.1} parent=75 // pred_region
          %s868 = sand.u32 %s215, 1
          %s869 = scalar_lea.sflag [#allocation5], %s868
          %s870 = sand.u32 %s215, 1
          %s871 = smul.addr %s870, 8
          %s872 = scalar_lea.vmem [#allocation12], %s871
          %874 = dma.done %s869, 128
        $region80: #{tpu_custom_call.1} parent=75 // pred_fallthru
          _
      $region76: #{tpu_custom_call.1} parent=5 // pred_fallthru
        _
    $region6: #{tpu_custom_call.1} parent=1 // loop_footer
      %s27 = sadd.s32 1, %s23
    $region7: #{tpu_custom_call.1} parent=1 // loop_footer_branch
      %22 = sbr.rel target = $region3
    $region8: #{tpu_custom_call.1} parent=1 // loop_exit
      _
    %875 = vsyncpa [#allocation4], 1
    %s876 = scalar_lea.sflag [#allocation4], 1
    %877 = vsyncpa %s876, 1
    %878 = vsyncpa [#allocation7], 1
    %s879 = scalar_lea.sflag [#allocation7], 1
    %880 = vsyncpa %s879, 1
    %881 = vsyncpa [#allocation10], 1
    %882 = vsyncpa [#allocation5], 1
    %s883 = scalar_lea.sflag [#allocation5], 1
    %884 = vsyncpa %s883, 1

</llo_original>
